<compile_context>
chip_gen: v7x
topology: tpu7x:2x2x1
jax: 0.10.0
libtpu: 0.0.40
codegen_flags: <defaults>
</compile_context>

<pallas_src>
import functools

import jax
import jax.numpy as jnp
from jax.experimental import pallas as pl
from jax.experimental.pallas import tpu as pltpu


def cppn_kernel(x_ref, w_in_ref, b_in_ref, w_hid_ref, b_hid_ref,
                w_out_ref, b_out_ref, o_ref, *, num_hidden):
    # x_ref: (2, block_n)   batch on the lane axis.
    x_t = x_ref[...]
    w_in = w_in_ref[...]                       # (H, 2)

    # Input linear as a VPU outer product: h_T = w_in[:,0] (x) x_T[0] + w_in[:,1] (x) x_T[1] + b.
    # (K=2 MXU matmul would waste almost the entire systolic pass.)
    h = (w_in[:, 0:1] * x_t[0:1, :]
         + w_in[:, 1:2] * x_t[1:2, :]
         + b_in_ref[...])                      # (H, block_n)

    # Hidden layers: tanh(W @ h + b), all lane-dense (batch on lanes).
    for i in range(num_hidden):
        h = jnp.tanh(
            jnp.dot(w_hid_ref[i], h, preferred_element_type=jnp.float32)
            + b_hid_ref[i])                    # (H, block_n)

    # Output layer: sigmoid(W_out @ h + b_out) -> (3, block_n), unmasked lane-dense stores.
    out = (jnp.dot(w_out_ref[...], h, preferred_element_type=jnp.float32)
           + b_out_ref[...])
    o_ref[...] = jax.nn.sigmoid(out).astype(o_ref.dtype)
    # NOTE: on v6e/v7x, casting activations/weights to bf16 (keeping f32 dots/accum)
    # relieves the EUP tanh slot further; kept f32 here so the 1e-5 reference check holds.


def cppn_forward(x, params, *, num_hidden, block_n=1024):
    """x: (N, 2) float32 -> (N, 3). Weights in PyTorch (out, in) layout, biases as columns."""
    w_in, b_in, w_hid, b_hid, w_out, b_out = params
    N = x.shape[0]
    H = w_in.shape[0]
    block_n = min(block_n, N)
    assert N % block_n == 0, "batch must be a multiple of block_n"
    assert block_n % 128 == 0, "block_n must be a multiple of 128 (lane width)"

    kernel = functools.partial(cppn_kernel, num_hidden=num_hidden)

    x_t = x.T  # (2, N): batch on the lane axis inside the kernel.

    grid = (N // block_n,)
    in_specs = [
        pl.BlockSpec((2, block_n), lambda i: (0, i)),               # x^T tile
        pl.BlockSpec((H, 2), lambda i: (0, 0)),                     # w_in  (H, 2)
        pl.BlockSpec((H, 1), lambda i: (0, 0)),                     # b_in  (H, 1)
        # TODO(synk): if H / num_hidden grow (e.g. H=1024), tile w_hid per layer
        # instead of keeping the full stack resident (v7x VMEM is only 64 MiB).
        pl.BlockSpec((num_hidden, H, H), lambda i: (0, 0, 0)),      # w_hid (L, H, H)
        pl.BlockSpec((num_hidden, H, 1), lambda i: (0, 0, 0)),      # b_hid (L, H, 1)
        pl.BlockSpec((3, H), lambda i: (0, 0)),                     # w_out (3, H)
        pl.BlockSpec((3, 1), lambda i: (0, 0)),                     # b_out (3, 1)
    ]
    out_specs = pl.BlockSpec((3, block_n), lambda i: (0, i))

    flops = 2 * N * (2 * H + num_hidden * H * H + 3 * H)
    transcendentals = N * (num_hidden * H + 3)
    bytes_accessed = 4 * (x.size + w_in.size + b_in.size + w_hid.size
                          + b_hid.size + w_out.size + b_out.size + 3 * N)

    out_t = pl.pallas_call(
        kernel,
        out_shape=jax.ShapeDtypeStruct((3, N), x.dtype),
        grid_spec=pltpu.PrefetchScalarGridSpec(
            num_scalar_prefetch=0,
            grid=grid,
            in_specs=in_specs,
            out_specs=out_specs,
        ),
        compiler_params=pltpu.CompilerParams(
            dimension_semantics=("parallel",)),
        cost_estimate=pl.CostEstimate(
            flops=flops,
            transcendentals=transcendentals,
            bytes_accessed=bytes_accessed),
    )(x_t, w_in, b_in, w_hid, b_hid, w_out, b_out)

    return out_t.T  # (N, 3)


def init_params(key, num_hidden, size_hidden):
    """Deterministic synthetic parameters in PyTorch nn.Linear layout (out, in); biases as columns."""
    H = size_hidden
    ks = jax.random.split(key, 6)
    w_in = jax.random.normal(ks[0], (H, 2), jnp.float32) * 0.5
    b_in = jax.random.normal(ks[1], (H, 1), jnp.float32) * 0.1
    w_hid = jax.random.normal(ks[2], (num_hidden, H, H), jnp.float32) * (1.0 / jnp.sqrt(H))
    b_hid = jax.random.normal(ks[3], (num_hidden, H, 1), jnp.float32) * 0.1
    w_out = jax.random.normal(ks[4], (3, H), jnp.float32) * (1.0 / jnp.sqrt(H))
    b_out = jax.random.normal(ks[5], (3, 1), jnp.float32) * 0.1
    return (w_in, b_in, w_hid, b_hid, w_out, b_out)


def cppn_reference(x, params, num_hidden):
    """Pure-JAX reference matching the PyTorch forward (weights are (out, in))."""
    w_in, b_in, w_hid, b_hid, w_out, b_out = params
    h = x @ w_in.T + b_in[:, 0]
    for i in range(num_hidden):
        h = jnp.tanh(h @ w_hid[i].T + b_hid[i, :, 0])
    return jax.nn.sigmoid(h @ w_out.T + b_out[:, 0])


if __name__ == "__main__":
    num_hidden = 3
    size_hidden = 32
    N = 2048           # batch of (x, y) coordinate pairs
    block_n = 1024     # -> grid of 2 steps (keeps both v7x TensorCores busy)

    key = jax.random.PRNGKey(0)
    k_x, k_p = jax.random.split(key)
    x = jax.random.uniform(k_x, (N, 2), jnp.float32, minval=-1.0, maxval=1.0)
    params = init_params(k_p, num_hidden, size_hidden)

    out = cppn_forward(x, params, num_hidden=num_hidden, block_n=block_n)
    out = jax.block_until_ready(out)

    ref = cppn_reference(x, params, num_hidden)
    assert out.shape == (N, 3)
    assert jnp.allclose(out, ref, atol=1e-5, rtol=1e-5), "mismatch vs reference"

    print("KERNEL_OK")
</pallas_src>

<mosaic_0001>
module attributes {stable_mosaic.version = 11 : i64} {
  func.func @cppn_kernel(%arg0: i32, %arg1: memref<2x1024xf32, #tpu.memory_space<vmem>>, %arg2: memref<32x2xf32, #tpu.memory_space<vmem>>, %arg3: memref<32x1xf32, #tpu.memory_space<vmem>>, %arg4: memref<3x32x32xf32, #tpu.memory_space<vmem>>, %arg5: memref<3x32x1xf32, #tpu.memory_space<vmem>>, %arg6: memref<3x32xf32, #tpu.memory_space<vmem>>, %arg7: memref<3x1xf32, #tpu.memory_space<vmem>>, %arg8: memref<3x1024xf32, #tpu.memory_space<vmem>>) attributes {dimension_semantics = [#tpu.dimension_semantics<parallel>], iteration_bounds = array<i64: 2>, scalar_prefetch = 0 : i64, scratch_operands = 0 : i64, tpu.core_type = #tpu.core_type<tc>, window_params = [{transform_indices = @transform_0, window_bounds = array<i64: 2, 1024>}, {pipeline_mode = #tpu.pipeline_mode<synchronous>, transform_indices = @transform_1, window_bounds = array<i64: 32, 2>}, {pipeline_mode = #tpu.pipeline_mode<synchronous>, transform_indices = @transform_2, window_bounds = array<i64: 32, 1>}, {pipeline_mode = #tpu.pipeline_mode<synchronous>, transform_indices = @transform_3, window_bounds = array<i64: 3, 32, 32>}, {pipeline_mode = #tpu.pipeline_mode<synchronous>, transform_indices = @transform_4, window_bounds = array<i64: 3, 32, 1>}, {pipeline_mode = #tpu.pipeline_mode<synchronous>, transform_indices = @transform_5, window_bounds = array<i64: 3, 32>}, {pipeline_mode = #tpu.pipeline_mode<synchronous>, transform_indices = @transform_6, window_bounds = array<i64: 3, 1>}, {transform_indices = @transform_7, window_bounds = array<i64: 3, 1024>}]} {
    %c0 = arith.constant 0 : index
    %c0_0 = arith.constant 0 : index
    %0 = vector.load %arg1[%c0, %c0_0] : memref<2x1024xf32, #tpu.memory_space<vmem>>, vector<2x1024xf32>
    %c0_1 = arith.constant 0 : index
    %c0_2 = arith.constant 0 : index
    %1 = vector.load %arg2[%c0_1, %c0_2] : memref<32x2xf32, #tpu.memory_space<vmem>>, vector<32x2xf32>
    %2 = vector.extract_strided_slice %1 {offsets = [0, 0], sizes = [32, 1], strides = [1, 1]} : vector<32x2xf32> to vector<32x1xf32>
    %3 = vector.extract_strided_slice %0 {offsets = [0, 0], sizes = [1, 1024], strides = [1, 1]} : vector<2x1024xf32> to vector<1x1024xf32>
    %4 = vector.broadcast %2 : vector<32x1xf32> to vector<32x1024xf32>
    %5 = vector.broadcast %3 : vector<1x1024xf32> to vector<32x1024xf32>
    %6 = arith.mulf %4, %5 : vector<32x1024xf32>
    %7 = vector.extract_strided_slice %1 {offsets = [0, 1], sizes = [32, 1], strides = [1, 1]} : vector<32x2xf32> to vector<32x1xf32>
    %8 = vector.extract_strided_slice %0 {offsets = [1, 0], sizes = [1, 1024], strides = [1, 1]} : vector<2x1024xf32> to vector<1x1024xf32>
    %9 = vector.broadcast %7 : vector<32x1xf32> to vector<32x1024xf32>
    %10 = vector.broadcast %8 : vector<1x1024xf32> to vector<32x1024xf32>
    %11 = arith.mulf %9, %10 : vector<32x1024xf32>
    %12 = arith.addf %6, %11 : vector<32x1024xf32>
    %c0_3 = arith.constant 0 : index
    %c0_4 = arith.constant 0 : index
    %13 = vector.load %arg3[%c0_3, %c0_4] : memref<32x1xf32, #tpu.memory_space<vmem>>, vector<32x1xf32>
    %14 = vector.broadcast %13 : vector<32x1xf32> to vector<32x1024xf32>
    %15 = arith.addf %12, %14 : vector<32x1024xf32>
    %c0_5 = arith.constant 0 : index
    %c0_6 = arith.constant 0 : index
    %c0_7 = arith.constant 0 : index
    %16 = vector.load %arg4[%c0_5, %c0_6, %c0_7] : memref<3x32x32xf32, #tpu.memory_space<vmem>>, vector<1x32x32xf32>
    %17 = vector.shape_cast %16 : vector<1x32x32xf32> to vector<32x32xf32>
    %cst = arith.constant dense<0.000000e+00> : vector<32x1024xf32>
    %18 = tpu.matmul %17, %15, %cst {dimension_numbers = #tpu.dot_dimension_numbers<[1], [0], [0], [1], [0, 0, 1, 1], [], []>} : vector<32x32xf32>, vector<32x1024xf32>, vector<32x1024xf32> -> vector<32x1024xf32>
    %c0_8 = arith.constant 0 : index
    %c0_9 = arith.constant 0 : index
    %c0_10 = arith.constant 0 : index
    %19 = vector.load %arg5[%c0_8, %c0_9, %c0_10] : memref<3x32x1xf32, #tpu.memory_space<vmem>>, vector<1x32x1xf32>
    %20 = vector.shape_cast %19 : vector<1x32x1xf32> to vector<32x1xf32>
    %21 = vector.broadcast %20 : vector<32x1xf32> to vector<32x1024xf32>
    %22 = arith.addf %18, %21 : vector<32x1024xf32>
    %23 = math.tanh %22 : vector<32x1024xf32>
    %c1 = arith.constant 1 : index
    %c0_11 = arith.constant 0 : index
    %c0_12 = arith.constant 0 : index
    %24 = vector.load %arg4[%c1, %c0_11, %c0_12] : memref<3x32x32xf32, #tpu.memory_space<vmem>>, vector<1x32x32xf32>
    %25 = vector.shape_cast %24 : vector<1x32x32xf32> to vector<32x32xf32>
    %cst_13 = arith.constant dense<0.000000e+00> : vector<32x1024xf32>
    %26 = tpu.matmul %25, %23, %cst_13 {dimension_numbers = #tpu.dot_dimension_numbers<[1], [0], [0], [1], [0, 0, 1, 1], [], []>} : vector<32x32xf32>, vector<32x1024xf32>, vector<32x1024xf32> -> vector<32x1024xf32>
    %c1_14 = arith.constant 1 : index
    %c0_15 = arith.constant 0 : index
    %c0_16 = arith.constant 0 : index
    %27 = vector.load %arg5[%c1_14, %c0_15, %c0_16] : memref<3x32x1xf32, #tpu.memory_space<vmem>>, vector<1x32x1xf32>
    %28 = vector.shape_cast %27 : vector<1x32x1xf32> to vector<32x1xf32>
    %29 = vector.broadcast %28 : vector<32x1xf32> to vector<32x1024xf32>
    %30 = arith.addf %26, %29 : vector<32x1024xf32>
    %31 = math.tanh %30 : vector<32x1024xf32>
    %c2 = arith.constant 2 : index
    %c0_17 = arith.constant 0 : index
    %c0_18 = arith.constant 0 : index
    %32 = vector.load %arg4[%c2, %c0_17, %c0_18] : memref<3x32x32xf32, #tpu.memory_space<vmem>>, vector<1x32x32xf32>
    %33 = vector.shape_cast %32 : vector<1x32x32xf32> to vector<32x32xf32>
    %cst_19 = arith.constant dense<0.000000e+00> : vector<32x1024xf32>
    %34 = tpu.matmul %33, %31, %cst_19 {dimension_numbers = #tpu.dot_dimension_numbers<[1], [0], [0], [1], [0, 0, 1, 1], [], []>} : vector<32x32xf32>, vector<32x1024xf32>, vector<32x1024xf32> -> vector<32x1024xf32>
    %c2_20 = arith.constant 2 : index
    %c0_21 = arith.constant 0 : index
    %c0_22 = arith.constant 0 : index
    %35 = vector.load %arg5[%c2_20, %c0_21, %c0_22] : memref<3x32x1xf32, #tpu.memory_space<vmem>>, vector<1x32x1xf32>
    %36 = vector.shape_cast %35 : vector<1x32x1xf32> to vector<32x1xf32>
    %37 = vector.broadcast %36 : vector<32x1xf32> to vector<32x1024xf32>
    %38 = arith.addf %34, %37 : vector<32x1024xf32>
    %39 = math.tanh %38 : vector<32x1024xf32>
    %c0_23 = arith.constant 0 : index
    %c0_24 = arith.constant 0 : index
    %40 = vector.load %arg6[%c0_23, %c0_24] : memref<3x32xf32, #tpu.memory_space<vmem>>, vector<3x32xf32>
    %cst_25 = arith.constant dense<0.000000e+00> : vector<3x1024xf32>
    %41 = tpu.matmul %40, %39, %cst_25 {dimension_numbers = #tpu.dot_dimension_numbers<[1], [0], [0], [1], [0, 0, 1, 1], [], []>} : vector<3x32xf32>, vector<32x1024xf32>, vector<3x1024xf32> -> vector<3x1024xf32>
    %c0_26 = arith.constant 0 : index
    %c0_27 = arith.constant 0 : index
    %42 = vector.load %arg7[%c0_26, %c0_27] : memref<3x1xf32, #tpu.memory_space<vmem>>, vector<3x1xf32>
    %43 = vector.broadcast %42 : vector<3x1xf32> to vector<3x1024xf32>
    %44 = arith.addf %41, %43 : vector<3x1024xf32>
    %45 = arith.negf %44 : vector<3x1024xf32>
    %46 = math.exp %45 : vector<3x1024xf32>
    %cst_28 = arith.constant 1.000000e+00 : f32
    %47 = vector.broadcast %cst_28 : f32 to vector<3x1024xf32>
    %48 = arith.addf %47, %46 : vector<3x1024xf32>
    %49 = arith.divf %47, %48 : vector<3x1024xf32>
    %c0_29 = arith.constant 0 : index
    %c0_30 = arith.constant 0 : index
    %50 = vector.load %arg8[%c0_29, %c0_30] : memref<3x1024xf32, #tpu.memory_space<vmem>>, vector<3x1024xf32>
    tpu.vector_store %arg8[%c0_29, %c0_30], %49 {strides = array<i32>} : memref<3x1024xf32, #tpu.memory_space<vmem>>, vector<3x1024xf32>,
    return
  }
  func.func @transform_0(%arg0: i32) -> (i32, i32) {
    %c0_i32 = arith.constant 0 : i32
    %c0_i32_0 = arith.constant 0 : i32
    return %c0_i32, %arg0 : i32, i32
  }
  func.func @transform_1(%arg0: i32) -> (i32, i32) {
    %c0_i32 = arith.constant 0 : i32
    %c0_i32_0 = arith.constant 0 : i32
    %c0_i32_1 = arith.constant 0 : i32
    return %c0_i32, %c0_i32_0 : i32, i32
  }
  func.func @transform_2(%arg0: i32) -> (i32, i32) {
    %c0_i32 = arith.constant 0 : i32
    %c0_i32_0 = arith.constant 0 : i32
    %c0_i32_1 = arith.constant 0 : i32
    return %c0_i32, %c0_i32_0 : i32, i32
  }
  func.func @transform_3(%arg0: i32) -> (i32, i32, i32) {
    %c0_i32 = arith.constant 0 : i32
    %c0_i32_0 = arith.constant 0 : i32
    %c0_i32_1 = arith.constant 0 : i32
    %c0_i32_2 = arith.constant 0 : i32
    return %c0_i32, %c0_i32_0, %c0_i32_1 : i32, i32, i32
  }
  func.func @transform_4(%arg0: i32) -> (i32, i32, i32) {
    %c0_i32 = arith.constant 0 : i32
    %c0_i32_0 = arith.constant 0 : i32
    %c0_i32_1 = arith.constant 0 : i32
    %c0_i32_2 = arith.constant 0 : i32
    return %c0_i32, %c0_i32_0, %c0_i32_1 : i32, i32, i32
  }
  func.func @transform_5(%arg0: i32) -> (i32, i32) {
    %c0_i32 = arith.constant 0 : i32
    %c0_i32_0 = arith.constant 0 : i32
    %c0_i32_1 = arith.constant 0 : i32
    return %c0_i32, %c0_i32_0 : i32, i32
  }
  func.func @transform_6(%arg0: i32) -> (i32, i32) {
    %c0_i32 = arith.constant 0 : i32
    %c0_i32_0 = arith.constant 0 : i32
    %c0_i32_1 = arith.constant 0 : i32
    return %c0_i32, %c0_i32_0 : i32, i32
  }
  func.func @transform_7(%arg0: i32) -> (i32, i32) {
    %c0_i32 = arith.constant 0 : i32
    %c0_i32_0 = arith.constant 0 : i32
    return %c0_i32, %arg0 : i32, i32
  }
}

</mosaic_0001>

<llo_original>
// kernel: tpu_custom_call.1
$region0: #{tpu_custom_call.1}
  #allocation0 [shape = 'u32[]', space=smem, size = 0x4, offset = 0x4, fixed_abs, tag = 'smem constant byte address 0x4 - core index']
  #allocation1 [shape = 'u32[144,128]{1,0:T(1,128)}', space=vmem, size = 0x12000, scoped, tag = 'internal scratch']
  %s0 = inlined_call_operand.vmem [shape: f32[2,2048], index: 0, kind: input, shape index: {}]
  %s1 = inlined_call_operand.vmem [shape: f32[32,2], index: 1, kind: input, shape index: {}]
  %s2 = inlined_call_operand.vmem [shape: f32[32,1], index: 2, kind: input, shape index: {}]
  %s3 = inlined_call_operand.vmem [shape: f32[3,32,32], index: 3, kind: input, shape index: {}]
  %s4 = inlined_call_operand.vmem [shape: f32[3,32,1], index: 4, kind: input, shape index: {}]
  %s5 = inlined_call_operand.vmem [shape: f32[3,32], index: 5, kind: input, shape index: {}]
  %s6 = inlined_call_operand.vmem [shape: f32[3,1], index: 6, kind: input, shape index: {}]
  %s7 = inlined_call_operand.hbm [shape: f32[3,2048], index: 7, kind: output, shape index: {}]
  %s8 = sld [smem:[#allocation0]]
  $region61: #{tpu_custom_call.1} parent=0
    _
  %s10 = ssub.s32 1, %s8
  %s11 = scalar_select 0, %s10, %s8
  $region1: #{tpu_custom_call.1} parent=0
    #allocation2 [shape = 'u8[32768]{0}', space=vmem, size = 0x8000, scoped, tag = 'output window, operand 0']
    #allocation3 [shape = 's32[2]{0}', space=sflag, size = 0x8, scoped, tag = 'scoped memory for tpu_custom_call.1']
    %12 = vsyncpa [#allocation3], 0
    %s13 = scalar_lea.sflag [#allocation3], 1
    %14 = vsyncpa %s13, 0
    loop: start=0, step=1, limit=4
    $region2: #{tpu_custom_call.1} parent=1 // loop_pre_header
      _
    $region3: #{tpu_custom_call.1} parent=1 // loop_header
      %s16 = sphi 0, %s20
      %p17 = scmp.ge.s32.totalorder %s16, 4
      %s26 = sphi 0, %s28
      %s29 = sphi 0, %s26
      %s30 = sphi 0, %s29
      %s46 = sphi 0, %s30
      %s50 = sphi 0, %s50
      %s52 = sphi 0, %s50
      %s53 = sphi 0, %s52
      %s67 = sphi 0, %s53
      %s71 = sphi 0, %s71
      %s73 = sphi 0, %s71
      %s74 = sphi 0, %s73
      %s88 = sphi 0, %s74
      %s92 = sphi 0, %s92
      %s94 = sphi 0, %s92
      %s95 = sphi 0, %s94
      %s109 = sphi 0, %s95
      %s113 = sphi 0, %s113
      %s115 = sphi 0, %s113
      %s116 = sphi 0, %s115
      %s130 = sphi 0, %s116
      %s134 = sphi 0, %s134
      %s136 = sphi 0, %s134
      %s137 = sphi 0, %s136
      %s151 = sphi 0, %s137
      %s155 = sphi 0, %s155
      %s157 = sphi 0, %s155
      %s158 = sphi 0, %s157
      %s172 = sphi 0, %s158
      %s178 = sphi 0, %s180
      %s181 = sphi 0, %s178
      %s182 = sphi 0, %s181
      %s198 = sphi 0, %s182
    $region4: #{tpu_custom_call.1} parent=1 // loop_header_branch
      %19 = sbr.rel (%p17) target = $region8
    $region5: #{tpu_custom_call.1} parent=1 // loop_body
      %s21 = ssub.s32 %s16, 1
      %s22 = ssub.s32 %s16, 2
      %s23 = sadd.s32 %s16, 1
      %s24 = ssub.s32 %s16, %s23
      %p25 = scmp.eq.s32.totalorder %s24, 0
      %s27 = sadd.s32 %s26, 1
      %s28 = scalar_select %p25, %s26, %s27
      %p31 = pneg %p25
      %p32 = scmp.eq.s32.totalorder %s16, 1
      %p33 = por %p31, %p32
      %p34 = scmp.ne.s32.totalorder %s26, %s29
      %p35 = scmp.eq.s32.totalorder %s16, 0
      %p36 = por %p34, %p35
      %p37 = scmp.ne.s32.totalorder %s26, %s29
      %p38 = scmp.eq.s32.totalorder %s21, 1
      %p39 = por %p37, %p38
      %p40 = scmp.ne.s32.totalorder %s29, %s30
      %p41 = scmp.eq.s32.totalorder %s21, 0
      %p42 = por %p40, %p41
      %p43 = scmp.ne.s32.totalorder %s29, %s30
      %p44 = scmp.eq.s32.totalorder %s22, 1
      %p45 = por %p43, %p44
      %p47 = scmp.ne.s32.totalorder %s30, %s46
      %p48 = scmp.eq.s32.totalorder %s22, 0
      %p49 = por %p47, %p48
      %s51 = sadd.s32 %s50, 1
      %p54 = scmp.eq.s32.totalorder %s16, 1
      %p55 = scmp.ne.s32.totalorder %s50, %s52
      %p56 = scmp.eq.s32.totalorder %s16, 0
      %p57 = por %p55, %p56
      %p58 = scmp.ne.s32.totalorder %s50, %s52
      %p59 = scmp.eq.s32.totalorder %s21, 1
      %p60 = por %p58, %p59
      %p61 = scmp.ne.s32.totalorder %s52, %s53
      %p62 = scmp.eq.s32.totalorder %s21, 0
      %p63 = por %p61, %p62
      %p64 = scmp.ne.s32.totalorder %s52, %s53
      %p65 = scmp.eq.s32.totalorder %s22, 1
      %p66 = por %p64, %p65
      %p68 = scmp.ne.s32.totalorder %s53, %s67
      %p69 = scmp.eq.s32.totalorder %s22, 0
      %p70 = por %p68, %p69
      %s72 = sadd.s32 %s71, 1
      %p75 = scmp.eq.s32.totalorder %s16, 1
      %p76 = scmp.ne.s32.totalorder %s71, %s73
      %p77 = scmp.eq.s32.totalorder %s16, 0
      %p78 = por %p76, %p77
      %p79 = scmp.ne.s32.totalorder %s71, %s73
      %p80 = scmp.eq.s32.totalorder %s21, 1
      %p81 = por %p79, %p80
      %p82 = scmp.ne.s32.totalorder %s73, %s74
      %p83 = scmp.eq.s32.totalorder %s21, 0
      %p84 = por %p82, %p83
      %p85 = scmp.ne.s32.totalorder %s73, %s74
      %p86 = scmp.eq.s32.totalorder %s22, 1
      %p87 = por %p85, %p86
      %p89 = scmp.ne.s32.totalorder %s74, %s88
      %p90 = scmp.eq.s32.totalorder %s22, 0
      %p91 = por %p89, %p90
      %s93 = sadd.s32 %s92, 1
      %p96 = scmp.eq.s32.totalorder %s16, 1
      %p97 = scmp.ne.s32.totalorder %s92, %s94
      %p98 = scmp.eq.s32.totalorder %s16, 0
      %p99 = por %p97, %p98
      %p100 = scmp.ne.s32.totalorder %s92, %s94
      %p101 = scmp.eq.s32.totalorder %s21, 1
      %p102 = por %p100, %p101
      %p103 = scmp.ne.s32.totalorder %s94, %s95
      %p104 = scmp.eq.s32.totalorder %s21, 0
      %p105 = por %p103, %p104
      %p106 = scmp.ne.s32.totalorder %s94, %s95
      %p107 = scmp.eq.s32.totalorder %s22, 1
      %p108 = por %p106, %p107
      %p110 = scmp.ne.s32.totalorder %s95, %s109
      %p111 = scmp.eq.s32.totalorder %s22, 0
      %p112 = por %p110, %p111
      %s114 = sadd.s32 %s113, 1
      %p117 = scmp.eq.s32.totalorder %s16, 1
      %p118 = scmp.ne.s32.totalorder %s113, %s115
      %p119 = scmp.eq.s32.totalorder %s16, 0
      %p120 = por %p118, %p119
      %p121 = scmp.ne.s32.totalorder %s113, %s115
      %p122 = scmp.eq.s32.totalorder %s21, 1
      %p123 = por %p121, %p122
      %p124 = scmp.ne.s32.totalorder %s115, %s116
      %p125 = scmp.eq.s32.totalorder %s21, 0
      %p126 = por %p124, %p125
      %p127 = scmp.ne.s32.totalorder %s115, %s116
      %p128 = scmp.eq.s32.totalorder %s22, 1
      %p129 = por %p127, %p128
      %p131 = scmp.ne.s32.totalorder %s116, %s130
      %p132 = scmp.eq.s32.totalorder %s22, 0
      %p133 = por %p131, %p132
      %s135 = sadd.s32 %s134, 1
      %p138 = scmp.eq.s32.totalorder %s16, 1
      %p139 = scmp.ne.s32.totalorder %s134, %s136
      %p140 = scmp.eq.s32.totalorder %s16, 0
      %p141 = por %p139, %p140
      %p142 = scmp.ne.s32.totalorder %s134, %s136
      %p143 = scmp.eq.s32.totalorder %s21, 1
      %p144 = por %p142, %p143
      %p145 = scmp.ne.s32.totalorder %s136, %s137
      %p146 = scmp.eq.s32.totalorder %s21, 0
      %p147 = por %p145, %p146
      %p148 = scmp.ne.s32.totalorder %s136, %s137
      %p149 = scmp.eq.s32.totalorder %s22, 1
      %p150 = por %p148, %p149
      %p152 = scmp.ne.s32.totalorder %s137, %s151
      %p153 = scmp.eq.s32.totalorder %s22, 0
      %p154 = por %p152, %p153
      %s156 = sadd.s32 %s155, 1
      %p159 = scmp.eq.s32.totalorder %s16, 1
      %p160 = scmp.ne.s32.totalorder %s155, %s157
      %p161 = scmp.eq.s32.totalorder %s16, 0
      %p162 = por %p160, %p161
      %p163 = scmp.ne.s32.totalorder %s155, %s157
      %p164 = scmp.eq.s32.totalorder %s21, 1
      %p165 = por %p163, %p164
      %p166 = scmp.ne.s32.totalorder %s157, %s158
      %p167 = scmp.eq.s32.totalorder %s21, 0
      %p168 = por %p166, %p167
      %p169 = scmp.ne.s32.totalorder %s157, %s158
      %p170 = scmp.eq.s32.totalorder %s22, 1
      %p171 = por %p169, %p170
      %p173 = scmp.ne.s32.totalorder %s158, %s172
      %p174 = scmp.eq.s32.totalorder %s22, 0
      %p175 = por %p173, %p174
      %s176 = ssub.s32 %s16, %s23
      %p177 = scmp.eq.s32.totalorder %s176, 0
      %s179 = sadd.s32 %s178, 1
      %s180 = scalar_select %p177, %s178, %s179
      %p183 = pneg %p177
      %p184 = scmp.eq.s32.totalorder %s16, 1
      %p185 = por %p183, %p184
      %p186 = scmp.ne.s32.totalorder %s178, %s181
      %p187 = scmp.eq.s32.totalorder %s16, 0
      %p188 = por %p186, %p187
      %p189 = scmp.ne.s32.totalorder %s178, %s181
      %p190 = scmp.eq.s32.totalorder %s21, 1
      %p191 = por %p189, %p190
      %p192 = scmp.ne.s32.totalorder %s181, %s182
      %p193 = scmp.eq.s32.totalorder %s21, 0
      %p194 = por %p192, %p193
      %p195 = scmp.ne.s32.totalorder %s181, %s182
      %p196 = scmp.eq.s32.totalorder %s22, 1
      %p197 = por %p195, %p196
      %p199 = scmp.ne.s32.totalorder %s182, %s198
      %p200 = scmp.eq.s32.totalorder %s22, 0
      %p201 = por %p199, %p200
      %p202 = scmp.le.s32.totalorder 1, %s16
      %p203 = scmp.lt.s32.totalorder %s16, 3
      %p204 = pnand %p202, %p203
      %p205 = pneg %p204
      // Predicated region
      $region9: #{tpu_custom_call.1} parent=5 // pred_check
        _
      $region10: #{tpu_custom_call.1} parent=5 // pred_check_branch
        %207 = sbr.rel (%p204) target = $region12
      $region11: #{tpu_custom_call.1} parent=5 // pred_region
        %s208 = ssub.s32 %s16, 1
        // Predicated region
        $region13: #{tpu_custom_call.1} parent=11 // pred_check
          %p209 = pneg %p63
        $region14: #{tpu_custom_call.1} parent=11 // pred_check_branch
          %211 = sbr.rel (%p209) target = $region16
        $region15: #{tpu_custom_call.1} parent=11 // pred_region
          _
        $region16: #{tpu_custom_call.1} parent=11 // pred_fallthru
          _
        // Predicated region
        $region17: #{tpu_custom_call.1} parent=11 // pred_check
          %p212 = pneg %p84
        $region18: #{tpu_custom_call.1} parent=11 // pred_check_branch
          %214 = sbr.rel (%p212) target = $region20
        $region19: #{tpu_custom_call.1} parent=11 // pred_region
          _
        $region20: #{tpu_custom_call.1} parent=11 // pred_fallthru
          _
        // Predicated region
        $region21: #{tpu_custom_call.1} parent=11 // pred_check
          %p215 = pneg %p105
        $region22: #{tpu_custom_call.1} parent=11 // pred_check_branch
          %217 = sbr.rel (%p215) target = $region24
        $region23: #{tpu_custom_call.1} parent=11 // pred_region
          _
        $region24: #{tpu_custom_call.1} parent=11 // pred_fallthru
          _
        // Predicated region
        $region25: #{tpu_custom_call.1} parent=11 // pred_check
          %p218 = pneg %p126
        $region26: #{tpu_custom_call.1} parent=11 // pred_check_branch
          %220 = sbr.rel (%p218) target = $region28
        $region27: #{tpu_custom_call.1} parent=11 // pred_region
          _
        $region28: #{tpu_custom_call.1} parent=11 // pred_fallthru
          _
        // Predicated region
        $region29: #{tpu_custom_call.1} parent=11 // pred_check
          %p221 = pneg %p147
        $region30: #{tpu_custom_call.1} parent=11 // pred_check_branch
          %223 = sbr.rel (%p221) target = $region32
        $region31: #{tpu_custom_call.1} parent=11 // pred_region
          _
        $region32: #{tpu_custom_call.1} parent=11 // pred_fallthru
          _
        // Predicated region
        $region33: #{tpu_custom_call.1} parent=11 // pred_check
          %p224 = pneg %p168
        $region34: #{tpu_custom_call.1} parent=11 // pred_check_branch
          %226 = sbr.rel (%p224) target = $region36
        $region35: #{tpu_custom_call.1} parent=11 // pred_region
          _
        $region36: #{tpu_custom_call.1} parent=11 // pred_fallthru
          _
      $region12: #{tpu_custom_call.1} parent=5 // pred_fallthru
        _
      %p227 = scmp.lt.s32.totalorder %s16, 2
      // Predicated region
      $region37: #{tpu_custom_call.1} parent=5 // pred_check
        %p228 = pneg %p227
      $region38: #{tpu_custom_call.1} parent=5 // pred_check_branch
        %230 = sbr.rel (%p228) target = $region40
      $region39: #{tpu_custom_call.1} parent=5 // pred_region
        // Predicated region
        $region41: #{tpu_custom_call.1} parent=39 // pred_check
          %p231 = pneg %p36
        $region42: #{tpu_custom_call.1} parent=39 // pred_check_branch
          %233 = sbr.rel (%p231) target = $region44
        $region43: #{tpu_custom_call.1} parent=39 // pred_region
          %s234 = smul.u32 8, %s16
          %p235 = scmp.lt.s32.totalorder %s234, 15
          %s236 = scalar_select %p235, %s234, 15
          %s237 = smul.addr %s236, 2
          %s238 = scalar_lea.vmem %s0, %s237
          %s239 = smul.u32 8, %s16
        $region44: #{tpu_custom_call.1} parent=39 // pred_fallthru
          _
      $region40: #{tpu_custom_call.1} parent=5 // pred_fallthru
        _
      %p240 = scmp.le.s32.totalorder 1, %s16
      %p241 = scmp.lt.s32.totalorder %s16, 3
      %p242 = pnand %p240, %p241
      %p243 = pneg %p242
      // Predicated region
      $region45: #{tpu_custom_call.1} parent=5 // pred_check
        _
      $region46: #{tpu_custom_call.1} parent=5 // pred_check_branch
        %245 = sbr.rel (%p242) target = $region48
      $region47: #{tpu_custom_call.1} parent=5 // pred_region
        %s246 = ssub.s32 %s16, 1
        %s247 = smul.u32 8, %s21
        %p248 = scmp.lt.s32.totalorder %s247, 15
        %s249 = scalar_select %p248, %s247, 15
        %s250 = smul.addr %s249, 2
        %s251 = scalar_lea.vmem %s0, %s250
        %p252 = pneg %p42
        %p253 = pneg %p39
        %p254 = pneg %p63
        %p255 = pneg %p60
        %p256 = pneg %p84
        %p257 = pneg %p81
        %p258 = pneg %p105
        %p259 = pneg %p102
        %p260 = pneg %p126
        %p261 = pneg %p123
        %p262 = pneg %p147
        %p263 = pneg %p144
        %p264 = pneg %p168
        %p265 = pneg %p165
        %p266 = pneg %p194
        %p267 = pneg %p191
        %s268 = sand.u32 %s181, 1
        %s269 = scalar_lea.sflag [#allocation3], %s268
        %s270 = sand.u32 %s181, 1
        %s271 = smul.addr %s270, 32
        %s272 = scalar_lea.vmem [#allocation2], %s271
        %s273 = smul.u32 8, %s21
        %p274 = scmp.lt.s32.totalorder %s273, 15
        %s275 = scalar_select %p274, %s273, 15
        %s276 = smul.addr %s275, 2
        %s277 = scalar_lea.vmem %s0, %s276
        %s278 = smul.u32 8, %s21
        %s279 = smul.u32 8, %s21
        %v280 = vld [vmem:[%s277] sm:$0xff]
        %v281 = vld [vmem:[%s277 + $0x8] sm:$0xff]
        %v282 = vld [vmem:[%s1] sm:$0xff]
        %v283 = vld [vmem:[%s1 + $0x8] sm:$0xff]
        %v284 = vld [vmem:[%s1 + $0x10] sm:$0xff]
        %v285 = vld [vmem:[%s1 + $0x18] sm:$0xff]
        %287 = vset.pattern.permute.xlu0 0
        %288 = vperm.xlu0 %287, %v282
        %v289 = vpop.permute.xlu0 %288
        %292 = vset.pattern.permute.xlu0 0
        %293 = vperm.xlu0 %292, %v283
        %v294 = vpop.permute.xlu0 %293
        %297 = vset.pattern.permute.xlu0 0
        %298 = vperm.xlu0 %297, %v284
        %v299 = vpop.permute.xlu0 %298
        %302 = vset.pattern.permute.xlu0 0
        %303 = vperm.xlu0 %302, %v285
        %v304 = vpop.permute.xlu0 %303
        %v308 = vlaneseq
        %v309 = vshrl.u32 %v308, 7
        %v310 = vsub.s32 0, %v309
        %v311 = vrot.slane %v280, %v310
        %v312 = vlaneseq
        %v313 = vshrl.u32 %v312, 7
        %v314 = vsub.s32 2, %v313
        %v315 = vrot.slane %v280, %v314
        %v316 = vlaneseq
        %v317 = vshrl.u32 %v316, 7
        %v318 = vsub.s32 4, %v317
        %v319 = vrot.slane %v280, %v318
        %v320 = vlaneseq
        %v321 = vshrl.u32 %v320, 7
        %v322 = vsub.s32 6, %v321
        %v323 = vrot.slane %v280, %v322
        %v324 = vlaneseq
        %v325 = vshrl.u32 %v324, 7
        %v326 = vsub.s32 0, %v325
        %v327 = vrot.slane %v281, %v326
        %v328 = vlaneseq
        %v329 = vshrl.u32 %v328, 7
        %v330 = vsub.s32 2, %v329
        %v331 = vrot.slane %v281, %v330
        %v332 = vlaneseq
        %v333 = vshrl.u32 %v332, 7
        %v334 = vsub.s32 4, %v333
        %v335 = vrot.slane %v281, %v334
        %v336 = vlaneseq
        %v337 = vshrl.u32 %v336, 7
        %v338 = vsub.s32 6, %v337
        %v339 = vrot.slane %v281, %v338
        %v348 = vlaneseq
        %v349 = vshrl.u32 %v348, 7
        %v350 = vsub.s32 0, %v349
        %v351 = vrot.slane %v311, %v350
        %v352 = vlaneseq
        %v353 = vshrl.u32 %v352, 7
        %v354 = vsub.s32 0, %v353
        %v355 = vrot.slane %v315, %v354
        %v356 = vlaneseq
        %v357 = vshrl.u32 %v356, 7
        %v358 = vsub.s32 0, %v357
        %v359 = vrot.slane %v319, %v358
        %v360 = vlaneseq
        %v361 = vshrl.u32 %v360, 7
        %v362 = vsub.s32 0, %v361
        %v363 = vrot.slane %v323, %v362
        %v364 = vlaneseq
        %v365 = vshrl.u32 %v364, 7
        %v366 = vsub.s32 0, %v365
        %v367 = vrot.slane %v327, %v366
        %v368 = vlaneseq
        %v369 = vshrl.u32 %v368, 7
        %v370 = vsub.s32 0, %v369
        %v371 = vrot.slane %v331, %v370
        %v372 = vlaneseq
        %v373 = vshrl.u32 %v372, 7
        %v374 = vsub.s32 0, %v373
        %v375 = vrot.slane %v335, %v374
        %v376 = vlaneseq
        %v377 = vshrl.u32 %v376, 7
        %v378 = vsub.s32 0, %v377
        %v379 = vrot.slane %v339, %v378
        %v380 = vmul.f32 %v289, %v351
        %v381 = vmul.f32 %v289, %v355
        %v382 = vmul.f32 %v289, %v359
        %v383 = vmul.f32 %v289, %v363
        %v384 = vmul.f32 %v289, %v367
        %v385 = vmul.f32 %v289, %v371
        %v386 = vmul.f32 %v289, %v375
        %v387 = vmul.f32 %v289, %v379
        %v388 = vmul.f32 %v294, %v351
        %v389 = vmul.f32 %v294, %v355
        %v390 = vmul.f32 %v294, %v359
        %v391 = vmul.f32 %v294, %v363
        %v392 = vmul.f32 %v294, %v367
        %v393 = vmul.f32 %v294, %v371
        %v394 = vmul.f32 %v294, %v375
        %v395 = vmul.f32 %v294, %v379
        %v396 = vmul.f32 %v299, %v351
        %v397 = vmul.f32 %v299, %v355
        %v398 = vmul.f32 %v299, %v359
        %v399 = vmul.f32 %v299, %v363
        %v400 = vmul.f32 %v299, %v367
        %v401 = vmul.f32 %v299, %v371
        %v402 = vmul.f32 %v299, %v375
        %v403 = vmul.f32 %v299, %v379
        %v404 = vmul.f32 %v304, %v351
        %v405 = vmul.f32 %v304, %v355
        %v406 = vmul.f32 %v304, %v359
        %v407 = vmul.f32 %v304, %v363
        %v408 = vmul.f32 %v304, %v367
        %v409 = vmul.f32 %v304, %v371
        %v410 = vmul.f32 %v304, %v375
        %v411 = vmul.f32 %v304, %v379
        %412 = vset.pattern.permute.xlu0 1
        %413 = vperm.xlu0 %412, %v282
        %v414 = vpop.permute.xlu0 %413
        %416 = vset.pattern.permute.xlu0 1
        %417 = vperm.xlu0 %416, %v283
        %v418 = vpop.permute.xlu0 %417
        %420 = vset.pattern.permute.xlu0 1
        %421 = vperm.xlu0 %420, %v284
        %v422 = vpop.permute.xlu0 %421
        %424 = vset.pattern.permute.xlu0 1
        %425 = vperm.xlu0 %424, %v285
        %v426 = vpop.permute.xlu0 %425
        %v428 = vlaneseq
        %v429 = vshrl.u32 %v428, 7
        %v430 = vsub.s32 1, %v429
        %v431 = vrot.slane %v280, %v430
        %v432 = vlaneseq
        %v433 = vshrl.u32 %v432, 7
        %v434 = vsub.s32 3, %v433
        %v435 = vrot.slane %v280, %v434
        %v436 = vlaneseq
        %v437 = vshrl.u32 %v436, 7
        %v438 = vsub.s32 5, %v437
        %v439 = vrot.slane %v280, %v438
        %v440 = vlaneseq
        %v441 = vshrl.u32 %v440, 7
        %v442 = vsub.s32 7, %v441
        %v443 = vrot.slane %v280, %v442
        %v444 = vlaneseq
        %v445 = vshrl.u32 %v444, 7
        %v446 = vsub.s32 1, %v445
        %v447 = vrot.slane %v281, %v446
        %v448 = vlaneseq
        %v449 = vshrl.u32 %v448, 7
        %v450 = vsub.s32 3, %v449
        %v451 = vrot.slane %v281, %v450
        %v452 = vlaneseq
        %v453 = vshrl.u32 %v452, 7
        %v454 = vsub.s32 5, %v453
        %v455 = vrot.slane %v281, %v454
        %v456 = vlaneseq
        %v457 = vshrl.u32 %v456, 7
        %v458 = vsub.s32 7, %v457
        %v459 = vrot.slane %v281, %v458
        %v468 = vlaneseq
        %v469 = vshrl.u32 %v468, 7
        %v470 = vsub.s32 1, %v469
        %v471 = vrot.slane %v431, %v470
        %v472 = vlaneseq
        %v473 = vshrl.u32 %v472, 7
        %v474 = vsub.s32 1, %v473
        %v475 = vrot.slane %v435, %v474
        %v476 = vlaneseq
        %v477 = vshrl.u32 %v476, 7
        %v478 = vsub.s32 1, %v477
        %v479 = vrot.slane %v439, %v478
        %v480 = vlaneseq
        %v481 = vshrl.u32 %v480, 7
        %v482 = vsub.s32 1, %v481
        %v483 = vrot.slane %v443, %v482
        %v484 = vlaneseq
        %v485 = vshrl.u32 %v484, 7
        %v486 = vsub.s32 1, %v485
        %v487 = vrot.slane %v447, %v486
        %v488 = vlaneseq
        %v489 = vshrl.u32 %v488, 7
        %v490 = vsub.s32 1, %v489
        %v491 = vrot.slane %v451, %v490
        %v492 = vlaneseq
        %v493 = vshrl.u32 %v492, 7
        %v494 = vsub.s32 1, %v493
        %v495 = vrot.slane %v455, %v494
        %v496 = vlaneseq
        %v497 = vshrl.u32 %v496, 7
        %v498 = vsub.s32 1, %v497
        %v499 = vrot.slane %v459, %v498
        %v500 = vmul.f32 %v414, %v471
        %v501 = vmul.f32 %v414, %v475
        %v502 = vmul.f32 %v414, %v479
        %v503 = vmul.f32 %v414, %v483
        %v504 = vmul.f32 %v414, %v487
        %v505 = vmul.f32 %v414, %v491
        %v506 = vmul.f32 %v414, %v495
        %v507 = vmul.f32 %v414, %v499
        %v508 = vmul.f32 %v418, %v471
        %v509 = vmul.f32 %v418, %v475
        %v510 = vmul.f32 %v418, %v479
        %v511 = vmul.f32 %v418, %v483
        %v512 = vmul.f32 %v418, %v487
        %v513 = vmul.f32 %v418, %v491
        %v514 = vmul.f32 %v418, %v495
        %v515 = vmul.f32 %v418, %v499
        %v516 = vmul.f32 %v422, %v471
        %v517 = vmul.f32 %v422, %v475
        %v518 = vmul.f32 %v422, %v479
        %v519 = vmul.f32 %v422, %v483
        %v520 = vmul.f32 %v422, %v487
        %v521 = vmul.f32 %v422, %v491
        %v522 = vmul.f32 %v422, %v495
        %v523 = vmul.f32 %v422, %v499
        %v524 = vmul.f32 %v426, %v471
        %v525 = vmul.f32 %v426, %v475
        %v526 = vmul.f32 %v426, %v479
        %v527 = vmul.f32 %v426, %v483
        %v528 = vmul.f32 %v426, %v487
        %v529 = vmul.f32 %v426, %v491
        %v530 = vmul.f32 %v426, %v495
        %v531 = vmul.f32 %v426, %v499
        %v532 = vadd.f32 %v380, %v500
        %v533 = vadd.f32 %v381, %v501
        %v534 = vadd.f32 %v382, %v502
        %v535 = vadd.f32 %v383, %v503
        %v536 = vadd.f32 %v384, %v504
        %v537 = vadd.f32 %v385, %v505
        %v538 = vadd.f32 %v386, %v506
        %v539 = vadd.f32 %v387, %v507
        %v540 = vadd.f32 %v388, %v508
        %v541 = vadd.f32 %v389, %v509
        %v542 = vadd.f32 %v390, %v510
        %v543 = vadd.f32 %v391, %v511
        %v544 = vadd.f32 %v392, %v512
        %v545 = vadd.f32 %v393, %v513
        %v546 = vadd.f32 %v394, %v514
        %v547 = vadd.f32 %v395, %v515
        %v548 = vadd.f32 %v396, %v516
        %v549 = vadd.f32 %v397, %v517
        %v550 = vadd.f32 %v398, %v518
        %v551 = vadd.f32 %v399, %v519
        %v552 = vadd.f32 %v400, %v520
        %v553 = vadd.f32 %v401, %v521
        %v554 = vadd.f32 %v402, %v522
        %v555 = vadd.f32 %v403, %v523
        %v556 = vadd.f32 %v404, %v524
        %v557 = vadd.f32 %v405, %v525
        %v558 = vadd.f32 %v406, %v526
        %v559 = vadd.f32 %v407, %v527
        %v560 = vadd.f32 %v408, %v528
        %v561 = vadd.f32 %v409, %v529
        %v562 = vadd.f32 %v410, %v530
        %v563 = vadd.f32 %v411, %v531
        %v564 = vld [vmem:[%s2] sm:$0xff]
        %v565 = vld [vmem:[%s2 + $0x8] sm:$0xff]
        %v566 = vld [vmem:[%s2 + $0x10] sm:$0xff]
        %v567 = vld [vmem:[%s2 + $0x18] sm:$0xff]
        %569 = vset.pattern.permute.xlu0 0
        %570 = vperm.xlu0 %569, %v564
        %v571 = vpop.permute.xlu0 %570
        %574 = vset.pattern.permute.xlu0 0
        %575 = vperm.xlu0 %574, %v565
        %v576 = vpop.permute.xlu0 %575
        %579 = vset.pattern.permute.xlu0 0
        %580 = vperm.xlu0 %579, %v566
        %v581 = vpop.permute.xlu0 %580
        %584 = vset.pattern.permute.xlu0 0
        %585 = vperm.xlu0 %584, %v567
        %v586 = vpop.permute.xlu0 %585
        %v588 = vadd.f32 %v532, %v571
        %v589 = vadd.f32 %v533, %v571
        %v590 = vadd.f32 %v534, %v571
        %v591 = vadd.f32 %v535, %v571
        %v592 = vadd.f32 %v536, %v571
        %v593 = vadd.f32 %v537, %v571
        %v594 = vadd.f32 %v538, %v571
        %v595 = vadd.f32 %v539, %v571
        %v596 = vadd.f32 %v540, %v576
        %v597 = vadd.f32 %v541, %v576
        %v598 = vadd.f32 %v542, %v576
        %v599 = vadd.f32 %v543, %v576
        %v600 = vadd.f32 %v544, %v576
        %v601 = vadd.f32 %v545, %v576
        %v602 = vadd.f32 %v546, %v576
        %v603 = vadd.f32 %v547, %v576
        %v604 = vadd.f32 %v548, %v581
        %v605 = vadd.f32 %v549, %v581
        %v606 = vadd.f32 %v550, %v581
        %v607 = vadd.f32 %v551, %v581
        %v608 = vadd.f32 %v552, %v581
        %v609 = vadd.f32 %v553, %v581
        %v610 = vadd.f32 %v554, %v581
        %v611 = vadd.f32 %v555, %v581
        %v612 = vadd.f32 %v556, %v586
        %v613 = vadd.f32 %v557, %v586
        %v614 = vadd.f32 %v558, %v586
        %v615 = vadd.f32 %v559, %v586
        %v616 = vadd.f32 %v560, %v586
        %v617 = vadd.f32 %v561, %v586
        %v618 = vadd.f32 %v562, %v586
        %v619 = vadd.f32 %v563, %v586
        %v620 = vld [vmem:[%s3] sm:$0xff]
        %v621 = vld [vmem:[%s3 + $0x8] sm:$0xff]
        %v622 = vld [vmem:[%s3 + $0x10] sm:$0xff]
        %v623 = vld [vmem:[%s3 + $0x18] sm:$0xff]
        %v624 = vld [vmem:[%s4] sm:$0xff]
        %v625 = vld [vmem:[%s4 + $0x8] sm:$0xff]
        %v626 = vld [vmem:[%s4 + $0x10] sm:$0xff]
        %v627 = vld [vmem:[%s4 + $0x18] sm:$0xff]
        %629 = vset.pattern.permute.xlu0 0
        %630 = vperm.xlu0 %629, %v624
        %v631 = vpop.permute.xlu0 %630
        %634 = vset.pattern.permute.xlu0 0
        %635 = vperm.xlu0 %634, %v625
        %v636 = vpop.permute.xlu0 %635
        %639 = vset.pattern.permute.xlu0 0
        %640 = vperm.xlu0 %639, %v626
        %v641 = vpop.permute.xlu0 %640
        %644 = vset.pattern.permute.xlu0 0
        %645 = vperm.xlu0 %644, %v627
        %v646 = vpop.permute.xlu0 %645
        %vm648 = vcmask 261120
        %v650 = vsel %vm648, %v620, 0
        %v653 = vsel %vm648, %v621, 0
        %v656 = vsel %vm648, %v622, 0
        %v659 = vsel %vm648, %v623, 0
        %661 = vmatprep.subr.mxu0 %v589
        %662 = vmatpush1.msra.mxu0 %v588
        %663 = vmatprep.subr.mxu0 %v597
        %664 = vmatpush1.msra.mxu0 %v596
        %665 = vmatprep.subr.mxu0 %v605
        %666 = vmatpush1.msra.mxu0 %v604
        %667 = vmatprep.subr.mxu0 %v613
        %668 = vmatpush1.msra.mxu0 %v612
        %669 = vmatprep.subr.mxu0 0.0
        %670 = vmatpush1.msra.mxu0 0.0
        %671 = vmatprep.subr.mxu0 0.0
        %672 = vmatpush1.msra.mxu0 0.0
        %673 = vmatprep.subr.mxu0 0.0
        %674 = vmatpush1.msra.mxu0 0.0
        %675 = vmatprep.subr.mxu0 0.0
        %676 = vmatpush1.msra.mxu0 0.0
        %677 = vmatprep.subr.mxu0 0.0
        %678 = vmatpush1.msra.mxu0 0.0
        %679 = vmatprep.subr.mxu0 0.0
        %680 = vmatpush1.msra.mxu0 0.0
        %681 = vmatprep.subr.mxu0 0.0
        %682 = vmatpush1.msra.mxu0 0.0
        %683 = vmatprep.subr.mxu0 0.0
        %684 = vmatpush1.msra.mxu0 0.0
        %685 = vmatprep.subr.mxu0 0.0
        %686 = vmatpush1.msra.mxu0 0.0
        %687 = vmatprep.subr.mxu0 0.0
        %688 = vmatpush1.msra.mxu0 0.0
        %689 = vmatprep.subr.mxu0 0.0
        %690 = vmatpush1.msra.mxu0 0.0
        %691 = vmatprep.subr.mxu0 0.0
        %692 = vmatpush1.msra.mxu0 0.0
        %693 = vmatprep.subr.mxu0 0.0
        %694 = vmatpush1.msra.mxu0 0.0
        %695 = vmatprep.subr.mxu0 0.0
        %696 = vmatpush1.msra.mxu0 0.0
        %697 = vmatprep.subr.mxu0 0.0
        %698 = vmatpush1.msra.mxu0 0.0
        %699 = vmatprep.subr.mxu0 0.0
        %700 = vmatpush1.msra.mxu0 0.0
        %701 = vmatprep.subr.mxu0 0.0
        %702 = vmatpush1.msra.mxu0 0.0
        %703 = vmatprep.subr.mxu0 0.0
        %704 = vmatpush1.msra.mxu0 0.0
        %705 = vmatprep.subr.mxu0 0.0
        %706 = vmatpush1.msra.mxu0 0.0
        %707 = vmatprep.subr.mxu0 0.0
        %708 = vmatpush1.msra.mxu0 0.0
        %709 = vmatprep.subr.mxu0 0.0
        %710 = vmatpush1.msra.mxu0 0.0
        %711 = vmatprep.subr.mxu0 0.0
        %712 = vmatpush1.msra.mxu0 0.0
        %713 = vmatprep.subr.mxu0 0.0
        %714 = vmatpush1.msra.mxu0 0.0
        %715 = vmatprep.subr.mxu0 0.0
        %716 = vmatpush1.msra.mxu0 0.0
        %717 = vmatprep.subr.mxu0 0.0
        %718 = vmatpush1.msra.mxu0 0.0
        %719 = vmatprep.subr.mxu0 0.0
        %720 = vmatpush1.msra.mxu0 0.0
        %721 = vmatprep.subr.mxu0 0.0
        %722 = vmatpush1.msra.mxu0 0.0
        %723 = vmatprep.subr.mxu0 0.0
        %724 = vmatpush1.msra.mxu0 0.0
        %725 = vmatprep.mubr.f32.mxu0 0.0
        %726 = vmatmul.mubr.f32.gmra.mrb[0].mxu0 %v650
        %v727 = vpop.f32.mrb[0].mxu0
        %v728 = vadd.f32 %v631, %v727
        %v729 = vpop.f32.mrb[0].mxu0
        %v730 = vadd.f32 %v631, %v729
        %731 = vmatprep.mubr.f32.mxu0 0.0
        %732 = vmatmul.mubr.f32.gmra.mrb[0].mxu0 %v653
        %v733 = vpop.f32.mrb[0].mxu0
        %v734 = vadd.f32 %v636, %v733
        %v735 = vpop.f32.mrb[0].mxu0
        %v736 = vadd.f32 %v636, %v735
        %737 = vmatprep.mubr.f32.mxu0 0.0
        %738 = vmatmul.mubr.f32.gmra.mrb[0].mxu0 %v656
        %v739 = vpop.f32.mrb[0].mxu0
        %v740 = vadd.f32 %v641, %v739
        %v741 = vpop.f32.mrb[0].mxu0
        %v742 = vadd.f32 %v641, %v741
        %743 = vmatprep.mubr.f32.mxu0 0.0
        %744 = vmatmul.mubr.f32.gmra.mrb[0].mxu0 %v659
        %v745 = vpop.f32.mrb[0].mxu0
        %v746 = vadd.f32 %v646, %v745
        %v747 = vpop.f32.mrb[0].mxu0
        %v748 = vadd.f32 %v646, %v747
        %749 = vdwg.mxu0
        %750 = vmatprep.subr.mxu0 %v591
        %751 = vmatpush1.msra.mxu0 %v590
        %752 = vmatprep.subr.mxu0 %v599
        %753 = vmatpush1.msra.mxu0 %v598
        %754 = vmatprep.subr.mxu0 %v607
        %755 = vmatpush1.msra.mxu0 %v606
        %756 = vmatprep.subr.mxu0 %v615
        %757 = vmatpush1.msra.mxu0 %v614
        %758 = vmatprep.subr.mxu0 0.0
        %759 = vmatpush1.msra.mxu0 0.0
        %760 = vmatprep.subr.mxu0 0.0
        %761 = vmatpush1.msra.mxu0 0.0
        %762 = vmatprep.subr.mxu0 0.0
        %763 = vmatpush1.msra.mxu0 0.0
        %764 = vmatprep.subr.mxu0 0.0
        %765 = vmatpush1.msra.mxu0 0.0
        %766 = vmatprep.subr.mxu0 0.0
        %767 = vmatpush1.msra.mxu0 0.0
        %768 = vmatprep.subr.mxu0 0.0
        %769 = vmatpush1.msra.mxu0 0.0
        %770 = vmatprep.subr.mxu0 0.0
        %771 = vmatpush1.msra.mxu0 0.0
        %772 = vmatprep.subr.mxu0 0.0
        %773 = vmatpush1.msra.mxu0 0.0
        %774 = vmatprep.subr.mxu0 0.0
        %775 = vmatpush1.msra.mxu0 0.0
        %776 = vmatprep.subr.mxu0 0.0
        %777 = vmatpush1.msra.mxu0 0.0
        %778 = vmatprep.subr.mxu0 0.0
        %779 = vmatpush1.msra.mxu0 0.0
        %780 = vmatprep.subr.mxu0 0.0
        %781 = vmatpush1.msra.mxu0 0.0
        %782 = vmatprep.subr.mxu0 0.0
        %783 = vmatpush1.msra.mxu0 0.0
        %784 = vmatprep.subr.mxu0 0.0
        %785 = vmatpush1.msra.mxu0 0.0
        %786 = vmatprep.subr.mxu0 0.0
        %787 = vmatpush1.msra.mxu0 0.0
        %788 = vmatprep.subr.mxu0 0.0
        %789 = vmatpush1.msra.mxu0 0.0
        %790 = vmatprep.subr.mxu0 0.0
        %791 = vmatpush1.msra.mxu0 0.0
        %792 = vmatprep.subr.mxu0 0.0
        %793 = vmatpush1.msra.mxu0 0.0
        %794 = vmatprep.subr.mxu0 0.0
        %795 = vmatpush1.msra.mxu0 0.0
        %796 = vmatprep.subr.mxu0 0.0
        %797 = vmatpush1.msra.mxu0 0.0
        %798 = vmatprep.subr.mxu0 0.0
        %799 = vmatpush1.msra.mxu0 0.0
        %800 = vmatprep.subr.mxu0 0.0
        %801 = vmatpush1.msra.mxu0 0.0
        %802 = vmatprep.subr.mxu0 0.0
        %803 = vmatpush1.msra.mxu0 0.0
        %804 = vmatprep.subr.mxu0 0.0
        %805 = vmatpush1.msra.mxu0 0.0
        %806 = vmatprep.subr.mxu0 0.0
        %807 = vmatpush1.msra.mxu0 0.0
        %808 = vmatprep.subr.mxu0 0.0
        %809 = vmatpush1.msra.mxu0 0.0
        %810 = vmatprep.subr.mxu0 0.0
        %811 = vmatpush1.msra.mxu0 0.0
        %812 = vmatprep.subr.mxu0 0.0
        %813 = vmatpush1.msra.mxu0 0.0
        %814 = vmatprep.mubr.f32.mxu0 0.0
        %815 = vmatmul.mubr.f32.gmra.mrb[0].mxu0 %v650
        %v816 = vpop.f32.mrb[0].mxu0
        %v817 = vadd.f32 %v631, %v816
        %v818 = vpop.f32.mrb[0].mxu0
        %v819 = vadd.f32 %v631, %v818
        %820 = vmatprep.mubr.f32.mxu0 0.0
        %821 = vmatmul.mubr.f32.gmra.mrb[0].mxu0 %v653
        %v822 = vpop.f32.mrb[0].mxu0
        %v823 = vadd.f32 %v636, %v822
        %v824 = vpop.f32.mrb[0].mxu0
        %v825 = vadd.f32 %v636, %v824
        %826 = vmatprep.mubr.f32.mxu0 0.0
        %827 = vmatmul.mubr.f32.gmra.mrb[0].mxu0 %v656
        %v828 = vpop.f32.mrb[0].mxu0
        %v829 = vadd.f32 %v641, %v828
        %v830 = vpop.f32.mrb[0].mxu0
        %v831 = vadd.f32 %v641, %v830
        %832 = vmatprep.mubr.f32.mxu0 0.0
        %833 = vmatmul.mubr.f32.gmra.mrb[0].mxu0 %v659
        %v834 = vpop.f32.mrb[0].mxu0
        %v835 = vadd.f32 %v646, %v834
        %v836 = vpop.f32.mrb[0].mxu0
        %v837 = vadd.f32 %v646, %v836
        %838 = vdwg.mxu0
        %839 = vmatprep.subr.mxu0 %v593
        %840 = vmatpush1.msra.mxu0 %v592
        %841 = vmatprep.subr.mxu0 %v601
        %842 = vmatpush1.msra.mxu0 %v600
        %843 = vmatprep.subr.mxu0 %v609
        %844 = vmatpush1.msra.mxu0 %v608
        %845 = vmatprep.subr.mxu0 %v617
        %846 = vmatpush1.msra.mxu0 %v616
        %847 = vmatprep.subr.mxu0 0.0
        %848 = vmatpush1.msra.mxu0 0.0
        %849 = vmatprep.subr.mxu0 0.0
        %850 = vmatpush1.msra.mxu0 0.0
        %851 = vmatprep.subr.mxu0 0.0
        %852 = vmatpush1.msra.mxu0 0.0
        %853 = vmatprep.subr.mxu0 0.0
        %854 = vmatpush1.msra.mxu0 0.0
        %855 = vmatprep.subr.mxu0 0.0
        %856 = vmatpush1.msra.mxu0 0.0
        %857 = vmatprep.subr.mxu0 0.0
        %858 = vmatpush1.msra.mxu0 0.0
        %859 = vmatprep.subr.mxu0 0.0
        %860 = vmatpush1.msra.mxu0 0.0
        %861 = vmatprep.subr.mxu0 0.0
        %862 = vmatpush1.msra.mxu0 0.0
        %863 = vmatprep.subr.mxu0 0.0
        %864 = vmatpush1.msra.mxu0 0.0
        %865 = vmatprep.subr.mxu0 0.0
        %866 = vmatpush1.msra.mxu0 0.0
        %867 = vmatprep.subr.mxu0 0.0
        %868 = vmatpush1.msra.mxu0 0.0
        %869 = vmatprep.subr.mxu0 0.0
        %870 = vmatpush1.msra.mxu0 0.0
        %871 = vmatprep.subr.mxu0 0.0
        %872 = vmatpush1.msra.mxu0 0.0
        %873 = vmatprep.subr.mxu0 0.0
        %874 = vmatpush1.msra.mxu0 0.0
        %875 = vmatprep.subr.mxu0 0.0
        %876 = vmatpush1.msra.mxu0 0.0
        %877 = vmatprep.subr.mxu0 0.0
        %878 = vmatpush1.msra.mxu0 0.0
        %879 = vmatprep.subr.mxu0 0.0
        %880 = vmatpush1.msra.mxu0 0.0
        %881 = vmatprep.subr.mxu0 0.0
        %882 = vmatpush1.msra.mxu0 0.0
        %883 = vmatprep.subr.mxu0 0.0
        %884 = vmatpush1.msra.mxu0 0.0
        %885 = vmatprep.subr.mxu0 0.0
        %886 = vmatpush1.msra.mxu0 0.0
        %887 = vmatprep.subr.mxu0 0.0
        %888 = vmatpush1.msra.mxu0 0.0
        %889 = vmatprep.subr.mxu0 0.0
        %890 = vmatpush1.msra.mxu0 0.0
        %891 = vmatprep.subr.mxu0 0.0
        %892 = vmatpush1.msra.mxu0 0.0
        %893 = vmatprep.subr.mxu0 0.0
        %894 = vmatpush1.msra.mxu0 0.0
        %895 = vmatprep.subr.mxu0 0.0
        %896 = vmatpush1.msra.mxu0 0.0
        %897 = vmatprep.subr.mxu0 0.0
        %898 = vmatpush1.msra.mxu0 0.0
        %899 = vmatprep.subr.mxu0 0.0
        %900 = vmatpush1.msra.mxu0 0.0
        %901 = vmatprep.subr.mxu0 0.0
        %902 = vmatpush1.msra.mxu0 0.0
        %903 = vmatprep.mubr.f32.mxu0 0.0
        %904 = vmatmul.mubr.f32.gmra.mrb[0].mxu0 %v650
        %v905 = vpop.f32.mrb[0].mxu0
        %v906 = vadd.f32 %v631, %v905
        %v907 = vpop.f32.mrb[0].mxu0
        %v908 = vadd.f32 %v631, %v907
        %909 = vmatprep.mubr.f32.mxu0 0.0
        %910 = vmatmul.mubr.f32.gmra.mrb[0].mxu0 %v653
        %v911 = vpop.f32.mrb[0].mxu0
        %v912 = vadd.f32 %v636, %v911
        %v913 = vpop.f32.mrb[0].mxu0
        %v914 = vadd.f32 %v636, %v913
        %915 = vmatprep.mubr.f32.mxu0 0.0
        %916 = vmatmul.mubr.f32.gmra.mrb[0].mxu0 %v656
        %v917 = vpop.f32.mrb[0].mxu0
        %v918 = vadd.f32 %v641, %v917
        %v919 = vpop.f32.mrb[0].mxu0
        %v920 = vadd.f32 %v641, %v919
        %921 = vmatprep.mubr.f32.mxu0 0.0
        %922 = vmatmul.mubr.f32.gmra.mrb[0].mxu0 %v659
        %v923 = vpop.f32.mrb[0].mxu0
        %v924 = vadd.f32 %v646, %v923
        %v925 = vpop.f32.mrb[0].mxu0
        %v926 = vadd.f32 %v646, %v925
        %927 = vdwg.mxu0
        %928 = vmatprep.subr.mxu0 %v595
        %929 = vmatpush1.msra.mxu0 %v594
        %930 = vmatprep.subr.mxu0 %v603
        %931 = vmatpush1.msra.mxu0 %v602
        %932 = vmatprep.subr.mxu0 %v611
        %933 = vmatpush1.msra.mxu0 %v610
        %934 = vmatprep.subr.mxu0 %v619
        %935 = vmatpush1.msra.mxu0 %v618
        %936 = vmatprep.subr.mxu0 0.0
        %937 = vmatpush1.msra.mxu0 0.0
        %938 = vmatprep.subr.mxu0 0.0
        %939 = vmatpush1.msra.mxu0 0.0
        %940 = vmatprep.subr.mxu0 0.0
        %941 = vmatpush1.msra.mxu0 0.0
        %942 = vmatprep.subr.mxu0 0.0
        %943 = vmatpush1.msra.mxu0 0.0
        %944 = vmatprep.subr.mxu0 0.0
        %945 = vmatpush1.msra.mxu0 0.0
        %946 = vmatprep.subr.mxu0 0.0
        %947 = vmatpush1.msra.mxu0 0.0
        %948 = vmatprep.subr.mxu0 0.0
        %949 = vmatpush1.msra.mxu0 0.0
        %950 = vmatprep.subr.mxu0 0.0
        %951 = vmatpush1.msra.mxu0 0.0
        %952 = vmatprep.subr.mxu0 0.0
        %953 = vmatpush1.msra.mxu0 0.0
        %954 = vmatprep.subr.mxu0 0.0
        %955 = vmatpush1.msra.mxu0 0.0
        %956 = vmatprep.subr.mxu0 0.0
        %957 = vmatpush1.msra.mxu0 0.0
        %958 = vmatprep.subr.mxu0 0.0
        %959 = vmatpush1.msra.mxu0 0.0
        %960 = vmatprep.subr.mxu0 0.0
        %961 = vmatpush1.msra.mxu0 0.0
        %962 = vmatprep.subr.mxu0 0.0
        %963 = vmatpush1.msra.mxu0 0.0
        %964 = vmatprep.subr.mxu0 0.0
        %965 = vmatpush1.msra.mxu0 0.0
        %966 = vmatprep.subr.mxu0 0.0
        %967 = vmatpush1.msra.mxu0 0.0
        %968 = vmatprep.subr.mxu0 0.0
        %969 = vmatpush1.msra.mxu0 0.0
        %970 = vmatprep.subr.mxu0 0.0
        %971 = vmatpush1.msra.mxu0 0.0
        %972 = vmatprep.subr.mxu0 0.0
        %973 = vmatpush1.msra.mxu0 0.0
        %974 = vmatprep.subr.mxu0 0.0
        %975 = vmatpush1.msra.mxu0 0.0
        %976 = vmatprep.subr.mxu0 0.0
        %977 = vmatpush1.msra.mxu0 0.0
        %978 = vmatprep.subr.mxu0 0.0
        %979 = vmatpush1.msra.mxu0 0.0
        %980 = vmatprep.subr.mxu0 0.0
        %981 = vmatpush1.msra.mxu0 0.0
        %982 = vmatprep.subr.mxu0 0.0
        %983 = vmatpush1.msra.mxu0 0.0
        %984 = vmatprep.subr.mxu0 0.0
        %985 = vmatpush1.msra.mxu0 0.0
        %986 = vmatprep.subr.mxu0 0.0
        %987 = vmatpush1.msra.mxu0 0.0
        %988 = vmatprep.subr.mxu0 0.0
        %989 = vmatpush1.msra.mxu0 0.0
        %990 = vmatprep.subr.mxu0 0.0
        %991 = vmatpush1.msra.mxu0 0.0
        %992 = vmatprep.mubr.f32.mxu0 0.0
        %993 = vmatmul.mubr.f32.gmra.mrb[0].mxu0 %v650
        %v994 = vpop.f32.mrb[0].mxu0
        %v995 = vadd.f32 %v631, %v994
        %v996 = vpop.f32.mrb[0].mxu0
        %v997 = vadd.f32 %v631, %v996
        %998 = vmatprep.mubr.f32.mxu0 0.0
        %999 = vmatmul.mubr.f32.gmra.mrb[0].mxu0 %v653
        %v1000 = vpop.f32.mrb[0].mxu0
        %v1001 = vadd.f32 %v636, %v1000
        %v1002 = vpop.f32.mrb[0].mxu0
        %v1003 = vadd.f32 %v636, %v1002
        %1004 = vmatprep.mubr.f32.mxu0 0.0
        %1005 = vmatmul.mubr.f32.gmra.mrb[0].mxu0 %v656
        %v1006 = vpop.f32.mrb[0].mxu0
        %v1007 = vadd.f32 %v641, %v1006
        %v1008 = vpop.f32.mrb[0].mxu0
        %v1009 = vadd.f32 %v641, %v1008
        %1010 = vmatprep.mubr.f32.mxu0 0.0
        %1011 = vmatmul.mubr.f32.gmra.mrb[0].mxu0 %v659
        %v1012 = vpop.f32.mrb[0].mxu0
        %v1013 = vadd.f32 %v646, %v1012
        %v1014 = vpop.f32.mrb[0].mxu0
        %v1015 = vadd.f32 %v646, %v1014
        %1016 = vdwg.mxu0
        %v1017 = vtanh.pop %v728
        %v1018 = vtanh.pop %v730
        %v1019 = vtanh.pop %v817
        %v1020 = vtanh.pop %v819
        %v1021 = vtanh.pop %v906
        %v1022 = vtanh.pop %v908
        %v1023 = vtanh.pop %v995
        %v1024 = vtanh.pop %v997
        %v1025 = vtanh.pop %v734
        %v1026 = vtanh.pop %v736
        %v1027 = vtanh.pop %v823
        %v1028 = vtanh.pop %v825
        %v1029 = vtanh.pop %v912
        %v1030 = vtanh.pop %v914
        %v1031 = vtanh.pop %v1001
        %v1032 = vtanh.pop %v1003
        %v1033 = vtanh.pop %v740
        %v1034 = vtanh.pop %v742
        %v1035 = vtanh.pop %v829
        %v1036 = vtanh.pop %v831
        %v1037 = vtanh.pop %v918
        %v1038 = vtanh.pop %v920
        %v1039 = vtanh.pop %v1007
        %v1040 = vtanh.pop %v1009
        %v1041 = vtanh.pop %v746
        %v1042 = vtanh.pop %v748
        %v1043 = vtanh.pop %v835
        %v1044 = vtanh.pop %v837
        %v1045 = vtanh.pop %v924
        %v1046 = vtanh.pop %v926
        %v1047 = vtanh.pop %v1013
        %v1048 = vtanh.pop %v1015
        %s1049 = scalar_lea.vmem %s3, 32
        %v1050 = vld [vmem:[%s1049] sm:$0xff]
        %v1051 = vld [vmem:[%s1049 + $0x8] sm:$0xff]
        %v1052 = vld [vmem:[%s1049 + $0x10] sm:$0xff]
        %v1053 = vld [vmem:[%s1049 + $0x18] sm:$0xff]
        %s1054 = scalar_lea.vmem %s4, 32
        %v1055 = vld [vmem:[%s1054] sm:$0xff]
        %v1056 = vld [vmem:[%s1054 + $0x8] sm:$0xff]
        %v1057 = vld [vmem:[%s1054 + $0x10] sm:$0xff]
        %v1058 = vld [vmem:[%s1054 + $0x18] sm:$0xff]
        %1060 = vset.pattern.permute.xlu0 0
        %1061 = vperm.xlu0 %1060, %v1055
        %v1062 = vpop.permute.xlu0 %1061
        %1065 = vset.pattern.permute.xlu0 0
        %1066 = vperm.xlu0 %1065, %v1056
        %v1067 = vpop.permute.xlu0 %1066
        %1070 = vset.pattern.permute.xlu0 0
        %1071 = vperm.xlu0 %1070, %v1057
        %v1072 = vpop.permute.xlu0 %1071
        %1075 = vset.pattern.permute.xlu0 0
        %1076 = vperm.xlu0 %1075, %v1058
        %v1077 = vpop.permute.xlu0 %1076
        %v1080 = vsel %vm648, %v1050, 0
        %v1083 = vsel %vm648, %v1051, 0
        %v1086 = vsel %vm648, %v1052, 0
        %v1089 = vsel %vm648, %v1053, 0
        %1091 = vmatprep.subr.mxu0 %v1018
        %1092 = vmatpush1.msra.mxu0 %v1017
        %1093 = vmatprep.subr.mxu0 %v1026
        %1094 = vmatpush1.msra.mxu0 %v1025
        %1095 = vmatprep.subr.mxu0 %v1034
        %1096 = vmatpush1.msra.mxu0 %v1033
        %1097 = vmatprep.subr.mxu0 %v1042
        %1098 = vmatpush1.msra.mxu0 %v1041
        %1099 = vmatprep.subr.mxu0 0.0
        %1100 = vmatpush1.msra.mxu0 0.0
        %1101 = vmatprep.subr.mxu0 0.0
        %1102 = vmatpush1.msra.mxu0 0.0
        %1103 = vmatprep.subr.mxu0 0.0
        %1104 = vmatpush1.msra.mxu0 0.0
        %1105 = vmatprep.subr.mxu0 0.0
        %1106 = vmatpush1.msra.mxu0 0.0
        %1107 = vmatprep.subr.mxu0 0.0
        %1108 = vmatpush1.msra.mxu0 0.0
        %1109 = vmatprep.subr.mxu0 0.0
        %1110 = vmatpush1.msra.mxu0 0.0
        %1111 = vmatprep.subr.mxu0 0.0
        %1112 = vmatpush1.msra.mxu0 0.0
        %1113 = vmatprep.subr.mxu0 0.0
        %1114 = vmatpush1.msra.mxu0 0.0
        %1115 = vmatprep.subr.mxu0 0.0
        %1116 = vmatpush1.msra.mxu0 0.0
        %1117 = vmatprep.subr.mxu0 0.0
        %1118 = vmatpush1.msra.mxu0 0.0
        %1119 = vmatprep.subr.mxu0 0.0
        %1120 = vmatpush1.msra.mxu0 0.0
        %1121 = vmatprep.subr.mxu0 0.0
        %1122 = vmatpush1.msra.mxu0 0.0
        %1123 = vmatprep.subr.mxu0 0.0
        %1124 = vmatpush1.msra.mxu0 0.0
        %1125 = vmatprep.subr.mxu0 0.0
        %1126 = vmatpush1.msra.mxu0 0.0
        %1127 = vmatprep.subr.mxu0 0.0
        %1128 = vmatpush1.msra.mxu0 0.0
        %1129 = vmatprep.subr.mxu0 0.0
        %1130 = vmatpush1.msra.mxu0 0.0
        %1131 = vmatprep.subr.mxu0 0.0
        %1132 = vmatpush1.msra.mxu0 0.0
        %1133 = vmatprep.subr.mxu0 0.0
        %1134 = vmatpush1.msra.mxu0 0.0
        %1135 = vmatprep.subr.mxu0 0.0
        %1136 = vmatpush1.msra.mxu0 0.0
        %1137 = vmatprep.subr.mxu0 0.0
        %1138 = vmatpush1.msra.mxu0 0.0
        %1139 = vmatprep.subr.mxu0 0.0
        %1140 = vmatpush1.msra.mxu0 0.0
        %1141 = vmatprep.subr.mxu0 0.0
        %1142 = vmatpush1.msra.mxu0 0.0
        %1143 = vmatprep.subr.mxu0 0.0
        %1144 = vmatpush1.msra.mxu0 0.0
        %1145 = vmatprep.subr.mxu0 0.0
        %1146 = vmatpush1.msra.mxu0 0.0
        %1147 = vmatprep.subr.mxu0 0.0
        %1148 = vmatpush1.msra.mxu0 0.0
        %1149 = vmatprep.subr.mxu0 0.0
        %1150 = vmatpush1.msra.mxu0 0.0
        %1151 = vmatprep.subr.mxu0 0.0
        %1152 = vmatpush1.msra.mxu0 0.0
        %1153 = vmatprep.subr.mxu0 0.0
        %1154 = vmatpush1.msra.mxu0 0.0
        %1155 = vmatprep.mubr.f32.mxu0 0.0
        %1156 = vmatmul.mubr.f32.gmra.mrb[0].mxu0 %v1080
        %v1157 = vpop.f32.mrb[0].mxu0
        %v1158 = vadd.f32 %v1062, %v1157
        %v1159 = vpop.f32.mrb[0].mxu0
        %v1160 = vadd.f32 %v1062, %v1159
        %1161 = vmatprep.mubr.f32.mxu0 0.0
        %1162 = vmatmul.mubr.f32.gmra.mrb[0].mxu0 %v1083
        %v1163 = vpop.f32.mrb[0].mxu0
        %v1164 = vadd.f32 %v1067, %v1163
        %v1165 = vpop.f32.mrb[0].mxu0
        %v1166 = vadd.f32 %v1067, %v1165
        %1167 = vmatprep.mubr.f32.mxu0 0.0
        %1168 = vmatmul.mubr.f32.gmra.mrb[0].mxu0 %v1086
        %v1169 = vpop.f32.mrb[0].mxu0
        %v1170 = vadd.f32 %v1072, %v1169
        %v1171 = vpop.f32.mrb[0].mxu0
        %v1172 = vadd.f32 %v1072, %v1171
        %1173 = vmatprep.mubr.f32.mxu0 0.0
        %1174 = vmatmul.mubr.f32.gmra.mrb[0].mxu0 %v1089
        %v1175 = vpop.f32.mrb[0].mxu0
        %v1176 = vadd.f32 %v1077, %v1175
        %v1177 = vpop.f32.mrb[0].mxu0
        %v1178 = vadd.f32 %v1077, %v1177
        %1179 = vdwg.mxu0
        %1180 = vmatprep.subr.mxu0 %v1020
        %1181 = vmatpush1.msra.mxu0 %v1019
        %1182 = vmatprep.subr.mxu0 %v1028
        %1183 = vmatpush1.msra.mxu0 %v1027
        %1184 = vmatprep.subr.mxu0 %v1036
        %1185 = vmatpush1.msra.mxu0 %v1035
        %1186 = vmatprep.subr.mxu0 %v1044
        %1187 = vmatpush1.msra.mxu0 %v1043
        %1188 = vmatprep.subr.mxu0 0.0
        %1189 = vmatpush1.msra.mxu0 0.0
        %1190 = vmatprep.subr.mxu0 0.0
        %1191 = vmatpush1.msra.mxu0 0.0
        %1192 = vmatprep.subr.mxu0 0.0
        %1193 = vmatpush1.msra.mxu0 0.0
        %1194 = vmatprep.subr.mxu0 0.0
        %1195 = vmatpush1.msra.mxu0 0.0
        %1196 = vmatprep.subr.mxu0 0.0
        %1197 = vmatpush1.msra.mxu0 0.0
        %1198 = vmatprep.subr.mxu0 0.0
        %1199 = vmatpush1.msra.mxu0 0.0
        %1200 = vmatprep.subr.mxu0 0.0
        %1201 = vmatpush1.msra.mxu0 0.0
        %1202 = vmatprep.subr.mxu0 0.0
        %1203 = vmatpush1.msra.mxu0 0.0
        %1204 = vmatprep.subr.mxu0 0.0
        %1205 = vmatpush1.msra.mxu0 0.0
        %1206 = vmatprep.subr.mxu0 0.0
        %1207 = vmatpush1.msra.mxu0 0.0
        %1208 = vmatprep.subr.mxu0 0.0
        %1209 = vmatpush1.msra.mxu0 0.0
        %1210 = vmatprep.subr.mxu0 0.0
        %1211 = vmatpush1.msra.mxu0 0.0
        %1212 = vmatprep.subr.mxu0 0.0
        %1213 = vmatpush1.msra.mxu0 0.0
        %1214 = vmatprep.subr.mxu0 0.0
        %1215 = vmatpush1.msra.mxu0 0.0
        %1216 = vmatprep.subr.mxu0 0.0
        %1217 = vmatpush1.msra.mxu0 0.0
        %1218 = vmatprep.subr.mxu0 0.0
        %1219 = vmatpush1.msra.mxu0 0.0
        %1220 = vmatprep.subr.mxu0 0.0
        %1221 = vmatpush1.msra.mxu0 0.0
        %1222 = vmatprep.subr.mxu0 0.0
        %1223 = vmatpush1.msra.mxu0 0.0
        %1224 = vmatprep.subr.mxu0 0.0
        %1225 = vmatpush1.msra.mxu0 0.0
        %1226 = vmatprep.subr.mxu0 0.0
        %1227 = vmatpush1.msra.mxu0 0.0
        %1228 = vmatprep.subr.mxu0 0.0
        %1229 = vmatpush1.msra.mxu0 0.0
        %1230 = vmatprep.subr.mxu0 0.0
        %1231 = vmatpush1.msra.mxu0 0.0
        %1232 = vmatprep.subr.mxu0 0.0
        %1233 = vmatpush1.msra.mxu0 0.0
        %1234 = vmatprep.subr.mxu0 0.0
        %1235 = vmatpush1.msra.mxu0 0.0
        %1236 = vmatprep.subr.mxu0 0.0
        %1237 = vmatpush1.msra.mxu0 0.0
        %1238 = vmatprep.subr.mxu0 0.0
        %1239 = vmatpush1.msra.mxu0 0.0
        %1240 = vmatprep.subr.mxu0 0.0
        %1241 = vmatpush1.msra.mxu0 0.0
        %1242 = vmatprep.subr.mxu0 0.0
        %1243 = vmatpush1.msra.mxu0 0.0
        %1244 = vmatprep.mubr.f32.mxu0 0.0
        %1245 = vmatmul.mubr.f32.gmra.mrb[0].mxu0 %v1080
        %v1246 = vpop.f32.mrb[0].mxu0
        %v1247 = vadd.f32 %v1062, %v1246
        %v1248 = vpop.f32.mrb[0].mxu0
        %v1249 = vadd.f32 %v1062, %v1248
        %1250 = vmatprep.mubr.f32.mxu0 0.0
        %1251 = vmatmul.mubr.f32.gmra.mrb[0].mxu0 %v1083
        %v1252 = vpop.f32.mrb[0].mxu0
        %v1253 = vadd.f32 %v1067, %v1252
        %v1254 = vpop.f32.mrb[0].mxu0
        %v1255 = vadd.f32 %v1067, %v1254
        %1256 = vmatprep.mubr.f32.mxu0 0.0
        %1257 = vmatmul.mubr.f32.gmra.mrb[0].mxu0 %v1086
        %v1258 = vpop.f32.mrb[0].mxu0
        %v1259 = vadd.f32 %v1072, %v1258
        %v1260 = vpop.f32.mrb[0].mxu0
        %v1261 = vadd.f32 %v1072, %v1260
        %1262 = vmatprep.mubr.f32.mxu0 0.0
        %1263 = vmatmul.mubr.f32.gmra.mrb[0].mxu0 %v1089
        %v1264 = vpop.f32.mrb[0].mxu0
        %v1265 = vadd.f32 %v1077, %v1264
        %v1266 = vpop.f32.mrb[0].mxu0
        %v1267 = vadd.f32 %v1077, %v1266
        %1268 = vdwg.mxu0
        %1269 = vmatprep.subr.mxu0 %v1022
        %1270 = vmatpush1.msra.mxu0 %v1021
        %1271 = vmatprep.subr.mxu0 %v1030
        %1272 = vmatpush1.msra.mxu0 %v1029
        %1273 = vmatprep.subr.mxu0 %v1038
        %1274 = vmatpush1.msra.mxu0 %v1037
        %1275 = vmatprep.subr.mxu0 %v1046
        %1276 = vmatpush1.msra.mxu0 %v1045
        %1277 = vmatprep.subr.mxu0 0.0
        %1278 = vmatpush1.msra.mxu0 0.0
        %1279 = vmatprep.subr.mxu0 0.0
        %1280 = vmatpush1.msra.mxu0 0.0
        %1281 = vmatprep.subr.mxu0 0.0
        %1282 = vmatpush1.msra.mxu0 0.0
        %1283 = vmatprep.subr.mxu0 0.0
        %1284 = vmatpush1.msra.mxu0 0.0
        %1285 = vmatprep.subr.mxu0 0.0
        %1286 = vmatpush1.msra.mxu0 0.0
        %1287 = vmatprep.subr.mxu0 0.0
        %1288 = vmatpush1.msra.mxu0 0.0
        %1289 = vmatprep.subr.mxu0 0.0
        %1290 = vmatpush1.msra.mxu0 0.0
        %1291 = vmatprep.subr.mxu0 0.0
        %1292 = vmatpush1.msra.mxu0 0.0
        %1293 = vmatprep.subr.mxu0 0.0
        %1294 = vmatpush1.msra.mxu0 0.0
        %1295 = vmatprep.subr.mxu0 0.0
        %1296 = vmatpush1.msra.mxu0 0.0
        %1297 = vmatprep.subr.mxu0 0.0
        %1298 = vmatpush1.msra.mxu0 0.0
        %1299 = vmatprep.subr.mxu0 0.0
        %1300 = vmatpush1.msra.mxu0 0.0
        %1301 = vmatprep.subr.mxu0 0.0
        %1302 = vmatpush1.msra.mxu0 0.0
        %1303 = vmatprep.subr.mxu0 0.0
        %1304 = vmatpush1.msra.mxu0 0.0
        %1305 = vmatprep.subr.mxu0 0.0
        %1306 = vmatpush1.msra.mxu0 0.0
        %1307 = vmatprep.subr.mxu0 0.0
        %1308 = vmatpush1.msra.mxu0 0.0
        %1309 = vmatprep.subr.mxu0 0.0
        %1310 = vmatpush1.msra.mxu0 0.0
        %1311 = vmatprep.subr.mxu0 0.0
        %1312 = vmatpush1.msra.mxu0 0.0
        %1313 = vmatprep.subr.mxu0 0.0
        %1314 = vmatpush1.msra.mxu0 0.0
        %1315 = vmatprep.subr.mxu0 0.0
        %1316 = vmatpush1.msra.mxu0 0.0
        %1317 = vmatprep.subr.mxu0 0.0
        %1318 = vmatpush1.msra.mxu0 0.0
        %1319 = vmatprep.subr.mxu0 0.0
        %1320 = vmatpush1.msra.mxu0 0.0
        %1321 = vmatprep.subr.mxu0 0.0
        %1322 = vmatpush1.msra.mxu0 0.0
        %1323 = vmatprep.subr.mxu0 0.0
        %1324 = vmatpush1.msra.mxu0 0.0
        %1325 = vmatprep.subr.mxu0 0.0
        %1326 = vmatpush1.msra.mxu0 0.0
        %1327 = vmatprep.subr.mxu0 0.0
        %1328 = vmatpush1.msra.mxu0 0.0
        %1329 = vmatprep.subr.mxu0 0.0
        %1330 = vmatpush1.msra.mxu0 0.0
        %1331 = vmatprep.subr.mxu0 0.0
        %1332 = vmatpush1.msra.mxu0 0.0
        %1333 = vmatprep.mubr.f32.mxu0 0.0
        %1334 = vmatmul.mubr.f32.gmra.mrb[0].mxu0 %v1080
        %v1335 = vpop.f32.mrb[0].mxu0
        %v1336 = vadd.f32 %v1062, %v1335
        %v1337 = vpop.f32.mrb[0].mxu0
        %v1338 = vadd.f32 %v1062, %v1337
        %1339 = vmatprep.mubr.f32.mxu0 0.0
        %1340 = vmatmul.mubr.f32.gmra.mrb[0].mxu0 %v1083
        %v1341 = vpop.f32.mrb[0].mxu0
        %v1342 = vadd.f32 %v1067, %v1341
        %v1343 = vpop.f32.mrb[0].mxu0
        %v1344 = vadd.f32 %v1067, %v1343
        %1345 = vmatprep.mubr.f32.mxu0 0.0
        %1346 = vmatmul.mubr.f32.gmra.mrb[0].mxu0 %v1086
        %v1347 = vpop.f32.mrb[0].mxu0
        %v1348 = vadd.f32 %v1072, %v1347
        %v1349 = vpop.f32.mrb[0].mxu0
        %v1350 = vadd.f32 %v1072, %v1349
        %1351 = vmatprep.mubr.f32.mxu0 0.0
        %1352 = vmatmul.mubr.f32.gmra.mrb[0].mxu0 %v1089
        %v1353 = vpop.f32.mrb[0].mxu0
        %v1354 = vadd.f32 %v1077, %v1353
        %v1355 = vpop.f32.mrb[0].mxu0
        %v1356 = vadd.f32 %v1077, %v1355
        %1357 = vdwg.mxu0
        %1358 = vmatprep.subr.mxu0 %v1024
        %1359 = vmatpush1.msra.mxu0 %v1023
        %1360 = vmatprep.subr.mxu0 %v1032
        %1361 = vmatpush1.msra.mxu0 %v1031
        %1362 = vmatprep.subr.mxu0 %v1040
        %1363 = vmatpush1.msra.mxu0 %v1039
        %1364 = vmatprep.subr.mxu0 %v1048
        %1365 = vmatpush1.msra.mxu0 %v1047
        %1366 = vmatprep.subr.mxu0 0.0
        %1367 = vmatpush1.msra.mxu0 0.0
        %1368 = vmatprep.subr.mxu0 0.0
        %1369 = vmatpush1.msra.mxu0 0.0
        %1370 = vmatprep.subr.mxu0 0.0
        %1371 = vmatpush1.msra.mxu0 0.0
        %1372 = vmatprep.subr.mxu0 0.0
        %1373 = vmatpush1.msra.mxu0 0.0
        %1374 = vmatprep.subr.mxu0 0.0
        %1375 = vmatpush1.msra.mxu0 0.0
        %1376 = vmatprep.subr.mxu0 0.0
        %1377 = vmatpush1.msra.mxu0 0.0
        %1378 = vmatprep.subr.mxu0 0.0
        %1379 = vmatpush1.msra.mxu0 0.0
        %1380 = vmatprep.subr.mxu0 0.0
        %1381 = vmatpush1.msra.mxu0 0.0
        %1382 = vmatprep.subr.mxu0 0.0
        %1383 = vmatpush1.msra.mxu0 0.0
        %1384 = vmatprep.subr.mxu0 0.0
        %1385 = vmatpush1.msra.mxu0 0.0
        %1386 = vmatprep.subr.mxu0 0.0
        %1387 = vmatpush1.msra.mxu0 0.0
        %1388 = vmatprep.subr.mxu0 0.0
        %1389 = vmatpush1.msra.mxu0 0.0
        %1390 = vmatprep.subr.mxu0 0.0
        %1391 = vmatpush1.msra.mxu0 0.0
        %1392 = vmatprep.subr.mxu0 0.0
        %1393 = vmatpush1.msra.mxu0 0.0
        %1394 = vmatprep.subr.mxu0 0.0
        %1395 = vmatpush1.msra.mxu0 0.0
        %1396 = vmatprep.subr.mxu0 0.0
        %1397 = vmatpush1.msra.mxu0 0.0
        %1398 = vmatprep.subr.mxu0 0.0
        %1399 = vmatpush1.msra.mxu0 0.0
        %1400 = vmatprep.subr.mxu0 0.0
        %1401 = vmatpush1.msra.mxu0 0.0
        %1402 = vmatprep.subr.mxu0 0.0
        %1403 = vmatpush1.msra.mxu0 0.0
        %1404 = vmatprep.subr.mxu0 0.0
        %1405 = vmatpush1.msra.mxu0 0.0
        %1406 = vmatprep.subr.mxu0 0.0
        %1407 = vmatpush1.msra.mxu0 0.0
        %1408 = vmatprep.subr.mxu0 0.0
        %1409 = vmatpush1.msra.mxu0 0.0
        %1410 = vmatprep.subr.mxu0 0.0
        %1411 = vmatpush1.msra.mxu0 0.0
        %1412 = vmatprep.subr.mxu0 0.0
        %1413 = vmatpush1.msra.mxu0 0.0
        %1414 = vmatprep.subr.mxu0 0.0
        %1415 = vmatpush1.msra.mxu0 0.0
        %1416 = vmatprep.subr.mxu0 0.0
        %1417 = vmatpush1.msra.mxu0 0.0
        %1418 = vmatprep.subr.mxu0 0.0
        %1419 = vmatpush1.msra.mxu0 0.0
        %1420 = vmatprep.subr.mxu0 0.0
        %1421 = vmatpush1.msra.mxu0 0.0
        %1422 = vmatprep.mubr.f32.mxu0 0.0
        %1423 = vmatmul.mubr.f32.gmra.mrb[0].mxu0 %v1080
        %v1424 = vpop.f32.mrb[0].mxu0
        %v1425 = vadd.f32 %v1062, %v1424
        %v1426 = vpop.f32.mrb[0].mxu0
        %v1427 = vadd.f32 %v1062, %v1426
        %1428 = vmatprep.mubr.f32.mxu0 0.0
        %1429 = vmatmul.mubr.f32.gmra.mrb[0].mxu0 %v1083
        %v1430 = vpop.f32.mrb[0].mxu0
        %v1431 = vadd.f32 %v1067, %v1430
        %v1432 = vpop.f32.mrb[0].mxu0
        %v1433 = vadd.f32 %v1067, %v1432
        %1434 = vmatprep.mubr.f32.mxu0 0.0
        %1435 = vmatmul.mubr.f32.gmra.mrb[0].mxu0 %v1086
        %v1436 = vpop.f32.mrb[0].mxu0
        %v1437 = vadd.f32 %v1072, %v1436
        %v1438 = vpop.f32.mrb[0].mxu0
        %v1439 = vadd.f32 %v1072, %v1438
        %1440 = vmatprep.mubr.f32.mxu0 0.0
        %1441 = vmatmul.mubr.f32.gmra.mrb[0].mxu0 %v1089
        %v1442 = vpop.f32.mrb[0].mxu0
        %v1443 = vadd.f32 %v1077, %v1442
        %v1444 = vpop.f32.mrb[0].mxu0
        %v1445 = vadd.f32 %v1077, %v1444
        %1446 = vdwg.mxu0
        %v1447 = vtanh.pop %v1158
        %v1448 = vtanh.pop %v1160
        %v1449 = vtanh.pop %v1247
        %v1450 = vtanh.pop %v1249
        %v1451 = vtanh.pop %v1336
        %v1452 = vtanh.pop %v1338
        %v1453 = vtanh.pop %v1425
        %v1454 = vtanh.pop %v1427
        %v1455 = vtanh.pop %v1164
        %v1456 = vtanh.pop %v1166
        %v1457 = vtanh.pop %v1253
        %v1458 = vtanh.pop %v1255
        %v1459 = vtanh.pop %v1342
        %v1460 = vtanh.pop %v1344
        %v1461 = vtanh.pop %v1431
        %v1462 = vtanh.pop %v1433
        %v1463 = vtanh.pop %v1170
        %v1464 = vtanh.pop %v1172
        %v1465 = vtanh.pop %v1259
        %v1466 = vtanh.pop %v1261
        %v1467 = vtanh.pop %v1348
        %v1468 = vtanh.pop %v1350
        %v1469 = vtanh.pop %v1437
        %v1470 = vtanh.pop %v1439
        %v1471 = vtanh.pop %v1176
        %v1472 = vtanh.pop %v1178
        %v1473 = vtanh.pop %v1265
        %v1474 = vtanh.pop %v1267
        %v1475 = vtanh.pop %v1354
        %v1476 = vtanh.pop %v1356
        %v1477 = vtanh.pop %v1443
        %v1478 = vtanh.pop %v1445
        %s1479 = scalar_lea.vmem %s3, 64
        %v1480 = vld [vmem:[%s1479] sm:$0xff]
        %v1481 = vld [vmem:[%s1479 + $0x8] sm:$0xff]
        %v1482 = vld [vmem:[%s1479 + $0x10] sm:$0xff]
        %v1483 = vld [vmem:[%s1479 + $0x18] sm:$0xff]
        %s1484 = scalar_lea.vmem %s4, 64
        %v1485 = vld [vmem:[%s1484] sm:$0xff]
        %v1486 = vld [vmem:[%s1484 + $0x8] sm:$0xff]
        %v1487 = vld [vmem:[%s1484 + $0x10] sm:$0xff]
        %v1488 = vld [vmem:[%s1484 + $0x18] sm:$0xff]
        %1490 = vset.pattern.permute.xlu0 0
        %1491 = vperm.xlu0 %1490, %v1485
        %v1492 = vpop.permute.xlu0 %1491
        %1495 = vset.pattern.permute.xlu0 0
        %1496 = vperm.xlu0 %1495, %v1486
        %v1497 = vpop.permute.xlu0 %1496
        %1500 = vset.pattern.permute.xlu0 0
        %1501 = vperm.xlu0 %1500, %v1487
        %v1502 = vpop.permute.xlu0 %1501
        %1505 = vset.pattern.permute.xlu0 0
        %1506 = vperm.xlu0 %1505, %v1488
        %v1507 = vpop.permute.xlu0 %1506
        %v1510 = vsel %vm648, %v1480, 0
        %v1513 = vsel %vm648, %v1481, 0
        %v1516 = vsel %vm648, %v1482, 0
        %v1519 = vsel %vm648, %v1483, 0
        %1521 = vmatprep.subr.mxu0 %v1448
        %1522 = vmatpush1.msra.mxu0 %v1447
        %1523 = vmatprep.subr.mxu0 %v1456
        %1524 = vmatpush1.msra.mxu0 %v1455
        %1525 = vmatprep.subr.mxu0 %v1464
        %1526 = vmatpush1.msra.mxu0 %v1463
        %1527 = vmatprep.subr.mxu0 %v1472
        %1528 = vmatpush1.msra.mxu0 %v1471
        %1529 = vmatprep.subr.mxu0 0.0
        %1530 = vmatpush1.msra.mxu0 0.0
        %1531 = vmatprep.subr.mxu0 0.0
        %1532 = vmatpush1.msra.mxu0 0.0
        %1533 = vmatprep.subr.mxu0 0.0
        %1534 = vmatpush1.msra.mxu0 0.0
        %1535 = vmatprep.subr.mxu0 0.0
        %1536 = vmatpush1.msra.mxu0 0.0
        %1537 = vmatprep.subr.mxu0 0.0
        %1538 = vmatpush1.msra.mxu0 0.0
        %1539 = vmatprep.subr.mxu0 0.0
        %1540 = vmatpush1.msra.mxu0 0.0
        %1541 = vmatprep.subr.mxu0 0.0
        %1542 = vmatpush1.msra.mxu0 0.0
        %1543 = vmatprep.subr.mxu0 0.0
        %1544 = vmatpush1.msra.mxu0 0.0
        %1545 = vmatprep.subr.mxu0 0.0
        %1546 = vmatpush1.msra.mxu0 0.0
        %1547 = vmatprep.subr.mxu0 0.0
        %1548 = vmatpush1.msra.mxu0 0.0
        %1549 = vmatprep.subr.mxu0 0.0
        %1550 = vmatpush1.msra.mxu0 0.0
        %1551 = vmatprep.subr.mxu0 0.0
        %1552 = vmatpush1.msra.mxu0 0.0
        %1553 = vmatprep.subr.mxu0 0.0
        %1554 = vmatpush1.msra.mxu0 0.0
        %1555 = vmatprep.subr.mxu0 0.0
        %1556 = vmatpush1.msra.mxu0 0.0
        %1557 = vmatprep.subr.mxu0 0.0
        %1558 = vmatpush1.msra.mxu0 0.0
        %1559 = vmatprep.subr.mxu0 0.0
        %1560 = vmatpush1.msra.mxu0 0.0
        %1561 = vmatprep.subr.mxu0 0.0
        %1562 = vmatpush1.msra.mxu0 0.0
        %1563 = vmatprep.subr.mxu0 0.0
        %1564 = vmatpush1.msra.mxu0 0.0
        %1565 = vmatprep.subr.mxu0 0.0
        %1566 = vmatpush1.msra.mxu0 0.0
        %1567 = vmatprep.subr.mxu0 0.0
        %1568 = vmatpush1.msra.mxu0 0.0
        %1569 = vmatprep.subr.mxu0 0.0
        %1570 = vmatpush1.msra.mxu0 0.0
        %1571 = vmatprep.subr.mxu0 0.0
        %1572 = vmatpush1.msra.mxu0 0.0
        %1573 = vmatprep.subr.mxu0 0.0
        %1574 = vmatpush1.msra.mxu0 0.0
        %1575 = vmatprep.subr.mxu0 0.0
        %1576 = vmatpush1.msra.mxu0 0.0
        %1577 = vmatprep.subr.mxu0 0.0
        %1578 = vmatpush1.msra.mxu0 0.0
        %1579 = vmatprep.subr.mxu0 0.0
        %1580 = vmatpush1.msra.mxu0 0.0
        %1581 = vmatprep.subr.mxu0 0.0
        %1582 = vmatpush1.msra.mxu0 0.0
        %1583 = vmatprep.subr.mxu0 0.0
        %1584 = vmatpush1.msra.mxu0 0.0
        %1585 = vmatprep.mubr.f32.mxu0 0.0
        %1586 = vmatmul.mubr.f32.gmra.mrb[0].mxu0 %v1510
        %v1587 = vpop.f32.mrb[0].mxu0
        %v1588 = vadd.f32 %v1492, %v1587
        %v1589 = vpop.f32.mrb[0].mxu0
        %v1590 = vadd.f32 %v1492, %v1589
        %1591 = vmatprep.mubr.f32.mxu0 0.0
        %1592 = vmatmul.mubr.f32.gmra.mrb[0].mxu0 %v1513
        %v1593 = vpop.f32.mrb[0].mxu0
        %v1594 = vadd.f32 %v1497, %v1593
        %v1595 = vpop.f32.mrb[0].mxu0
        %v1596 = vadd.f32 %v1497, %v1595
        %1597 = vmatprep.mubr.f32.mxu0 0.0
        %1598 = vmatmul.mubr.f32.gmra.mrb[0].mxu0 %v1516
        %v1599 = vpop.f32.mrb[0].mxu0
        %v1600 = vadd.f32 %v1502, %v1599
        %v1601 = vpop.f32.mrb[0].mxu0
        %v1602 = vadd.f32 %v1502, %v1601
        %1603 = vmatprep.mubr.f32.mxu0 0.0
        %1604 = vmatmul.mubr.f32.gmra.mrb[0].mxu0 %v1519
        %v1605 = vpop.f32.mrb[0].mxu0
        %v1606 = vadd.f32 %v1507, %v1605
        %v1607 = vpop.f32.mrb[0].mxu0
        %v1608 = vadd.f32 %v1507, %v1607
        %1609 = vdwg.mxu0
        %1610 = vmatprep.subr.mxu0 %v1450
        %1611 = vmatpush1.msra.mxu0 %v1449
        %1612 = vmatprep.subr.mxu0 %v1458
        %1613 = vmatpush1.msra.mxu0 %v1457
        %1614 = vmatprep.subr.mxu0 %v1466
        %1615 = vmatpush1.msra.mxu0 %v1465
        %1616 = vmatprep.subr.mxu0 %v1474
        %1617 = vmatpush1.msra.mxu0 %v1473
        %1618 = vmatprep.subr.mxu0 0.0
        %1619 = vmatpush1.msra.mxu0 0.0
        %1620 = vmatprep.subr.mxu0 0.0
        %1621 = vmatpush1.msra.mxu0 0.0
        %1622 = vmatprep.subr.mxu0 0.0
        %1623 = vmatpush1.msra.mxu0 0.0
        %1624 = vmatprep.subr.mxu0 0.0
        %1625 = vmatpush1.msra.mxu0 0.0
        %1626 = vmatprep.subr.mxu0 0.0
        %1627 = vmatpush1.msra.mxu0 0.0
        %1628 = vmatprep.subr.mxu0 0.0
        %1629 = vmatpush1.msra.mxu0 0.0
        %1630 = vmatprep.subr.mxu0 0.0
        %1631 = vmatpush1.msra.mxu0 0.0
        %1632 = vmatprep.subr.mxu0 0.0
        %1633 = vmatpush1.msra.mxu0 0.0
        %1634 = vmatprep.subr.mxu0 0.0
        %1635 = vmatpush1.msra.mxu0 0.0
        %1636 = vmatprep.subr.mxu0 0.0
        %1637 = vmatpush1.msra.mxu0 0.0
        %1638 = vmatprep.subr.mxu0 0.0
        %1639 = vmatpush1.msra.mxu0 0.0
        %1640 = vmatprep.subr.mxu0 0.0
        %1641 = vmatpush1.msra.mxu0 0.0
        %1642 = vmatprep.subr.mxu0 0.0
        %1643 = vmatpush1.msra.mxu0 0.0
        %1644 = vmatprep.subr.mxu0 0.0
        %1645 = vmatpush1.msra.mxu0 0.0
        %1646 = vmatprep.subr.mxu0 0.0
        %1647 = vmatpush1.msra.mxu0 0.0
        %1648 = vmatprep.subr.mxu0 0.0
        %1649 = vmatpush1.msra.mxu0 0.0
        %1650 = vmatprep.subr.mxu0 0.0
        %1651 = vmatpush1.msra.mxu0 0.0
        %1652 = vmatprep.subr.mxu0 0.0
        %1653 = vmatpush1.msra.mxu0 0.0
        %1654 = vmatprep.subr.mxu0 0.0
        %1655 = vmatpush1.msra.mxu0 0.0
        %1656 = vmatprep.subr.mxu0 0.0
        %1657 = vmatpush1.msra.mxu0 0.0
        %1658 = vmatprep.subr.mxu0 0.0
        %1659 = vmatpush1.msra.mxu0 0.0
        %1660 = vmatprep.subr.mxu0 0.0
        %1661 = vmatpush1.msra.mxu0 0.0
        %1662 = vmatprep.subr.mxu0 0.0
        %1663 = vmatpush1.msra.mxu0 0.0
        %1664 = vmatprep.subr.mxu0 0.0
        %1665 = vmatpush1.msra.mxu0 0.0
        %1666 = vmatprep.subr.mxu0 0.0
        %1667 = vmatpush1.msra.mxu0 0.0
        %1668 = vmatprep.subr.mxu0 0.0
        %1669 = vmatpush1.msra.mxu0 0.0
        %1670 = vmatprep.subr.mxu0 0.0
        %1671 = vmatpush1.msra.mxu0 0.0
        %1672 = vmatprep.subr.mxu0 0.0
        %1673 = vmatpush1.msra.mxu0 0.0
        %1674 = vmatprep.mubr.f32.mxu0 0.0
        %1675 = vmatmul.mubr.f32.gmra.mrb[0].mxu0 %v1510
        %v1676 = vpop.f32.mrb[0].mxu0
        %v1677 = vadd.f32 %v1492, %v1676
        %v1678 = vpop.f32.mrb[0].mxu0
        %v1679 = vadd.f32 %v1492, %v1678
        %1680 = vmatprep.mubr.f32.mxu0 0.0
        %1681 = vmatmul.mubr.f32.gmra.mrb[0].mxu0 %v1513
        %v1682 = vpop.f32.mrb[0].mxu0
        %v1683 = vadd.f32 %v1497, %v1682
        %v1684 = vpop.f32.mrb[0].mxu0
        %v1685 = vadd.f32 %v1497, %v1684
        %1686 = vmatprep.mubr.f32.mxu0 0.0
        %1687 = vmatmul.mubr.f32.gmra.mrb[0].mxu0 %v1516
        %v1688 = vpop.f32.mrb[0].mxu0
        %v1689 = vadd.f32 %v1502, %v1688
        %v1690 = vpop.f32.mrb[0].mxu0
        %v1691 = vadd.f32 %v1502, %v1690
        %1692 = vmatprep.mubr.f32.mxu0 0.0
        %1693 = vmatmul.mubr.f32.gmra.mrb[0].mxu0 %v1519
        %v1694 = vpop.f32.mrb[0].mxu0
        %v1695 = vadd.f32 %v1507, %v1694
        %v1696 = vpop.f32.mrb[0].mxu0
        %v1697 = vadd.f32 %v1507, %v1696
        %1698 = vdwg.mxu0
        %1699 = vmatprep.subr.mxu0 %v1452
        %1700 = vmatpush1.msra.mxu0 %v1451
        %1701 = vmatprep.subr.mxu0 %v1460
        %1702 = vmatpush1.msra.mxu0 %v1459
        %1703 = vmatprep.subr.mxu0 %v1468
        %1704 = vmatpush1.msra.mxu0 %v1467
        %1705 = vmatprep.subr.mxu0 %v1476
        %1706 = vmatpush1.msra.mxu0 %v1475
        %1707 = vmatprep.subr.mxu0 0.0
        %1708 = vmatpush1.msra.mxu0 0.0
        %1709 = vmatprep.subr.mxu0 0.0
        %1710 = vmatpush1.msra.mxu0 0.0
        %1711 = vmatprep.subr.mxu0 0.0
        %1712 = vmatpush1.msra.mxu0 0.0
        %1713 = vmatprep.subr.mxu0 0.0
        %1714 = vmatpush1.msra.mxu0 0.0
        %1715 = vmatprep.subr.mxu0 0.0
        %1716 = vmatpush1.msra.mxu0 0.0
        %1717 = vmatprep.subr.mxu0 0.0
        %1718 = vmatpush1.msra.mxu0 0.0
        %1719 = vmatprep.subr.mxu0 0.0
        %1720 = vmatpush1.msra.mxu0 0.0
        %1721 = vmatprep.subr.mxu0 0.0
        %1722 = vmatpush1.msra.mxu0 0.0
        %1723 = vmatprep.subr.mxu0 0.0
        %1724 = vmatpush1.msra.mxu0 0.0
        %1725 = vmatprep.subr.mxu0 0.0
        %1726 = vmatpush1.msra.mxu0 0.0
        %1727 = vmatprep.subr.mxu0 0.0
        %1728 = vmatpush1.msra.mxu0 0.0
        %1729 = vmatprep.subr.mxu0 0.0
        %1730 = vmatpush1.msra.mxu0 0.0
        %1731 = vmatprep.subr.mxu0 0.0
        %1732 = vmatpush1.msra.mxu0 0.0
        %1733 = vmatprep.subr.mxu0 0.0
        %1734 = vmatpush1.msra.mxu0 0.0
        %1735 = vmatprep.subr.mxu0 0.0
        %1736 = vmatpush1.msra.mxu0 0.0
        %1737 = vmatprep.subr.mxu0 0.0
        %1738 = vmatpush1.msra.mxu0 0.0
        %1739 = vmatprep.subr.mxu0 0.0
        %1740 = vmatpush1.msra.mxu0 0.0
        %1741 = vmatprep.subr.mxu0 0.0
        %1742 = vmatpush1.msra.mxu0 0.0
        %1743 = vmatprep.subr.mxu0 0.0
        %1744 = vmatpush1.msra.mxu0 0.0
        %1745 = vmatprep.subr.mxu0 0.0
        %1746 = vmatpush1.msra.mxu0 0.0
        %1747 = vmatprep.subr.mxu0 0.0
        %1748 = vmatpush1.msra.mxu0 0.0
        %1749 = vmatprep.subr.mxu0 0.0
        %1750 = vmatpush1.msra.mxu0 0.0
        %1751 = vmatprep.subr.mxu0 0.0
        %1752 = vmatpush1.msra.mxu0 0.0
        %1753 = vmatprep.subr.mxu0 0.0
        %1754 = vmatpush1.msra.mxu0 0.0
        %1755 = vmatprep.subr.mxu0 0.0
        %1756 = vmatpush1.msra.mxu0 0.0
        %1757 = vmatprep.subr.mxu0 0.0
        %1758 = vmatpush1.msra.mxu0 0.0
        %1759 = vmatprep.subr.mxu0 0.0
        %1760 = vmatpush1.msra.mxu0 0.0
        %1761 = vmatprep.subr.mxu0 0.0
        %1762 = vmatpush1.msra.mxu0 0.0
        %1763 = vmatprep.mubr.f32.mxu0 0.0
        %1764 = vmatmul.mubr.f32.gmra.mrb[0].mxu0 %v1510
        %v1765 = vpop.f32.mrb[0].mxu0
        %v1766 = vadd.f32 %v1492, %v1765
        %v1767 = vpop.f32.mrb[0].mxu0
        %v1768 = vadd.f32 %v1492, %v1767
        %1769 = vmatprep.mubr.f32.mxu0 0.0
        %1770 = vmatmul.mubr.f32.gmra.mrb[0].mxu0 %v1513
        %v1771 = vpop.f32.mrb[0].mxu0
        %v1772 = vadd.f32 %v1497, %v1771
        %v1773 = vpop.f32.mrb[0].mxu0
        %v1774 = vadd.f32 %v1497, %v1773
        %1775 = vmatprep.mubr.f32.mxu0 0.0
        %1776 = vmatmul.mubr.f32.gmra.mrb[0].mxu0 %v1516
        %v1777 = vpop.f32.mrb[0].mxu0
        %v1778 = vadd.f32 %v1502, %v1777
        %v1779 = vpop.f32.mrb[0].mxu0
        %v1780 = vadd.f32 %v1502, %v1779
        %1781 = vmatprep.mubr.f32.mxu0 0.0
        %1782 = vmatmul.mubr.f32.gmra.mrb[0].mxu0 %v1519
        %v1783 = vpop.f32.mrb[0].mxu0
        %v1784 = vadd.f32 %v1507, %v1783
        %v1785 = vpop.f32.mrb[0].mxu0
        %v1786 = vadd.f32 %v1507, %v1785
        %1787 = vdwg.mxu0
        %1788 = vmatprep.subr.mxu0 %v1454
        %1789 = vmatpush1.msra.mxu0 %v1453
        %1790 = vmatprep.subr.mxu0 %v1462
        %1791 = vmatpush1.msra.mxu0 %v1461
        %1792 = vmatprep.subr.mxu0 %v1470
        %1793 = vmatpush1.msra.mxu0 %v1469
        %1794 = vmatprep.subr.mxu0 %v1478
        %1795 = vmatpush1.msra.mxu0 %v1477
        %1796 = vmatprep.subr.mxu0 0.0
        %1797 = vmatpush1.msra.mxu0 0.0
        %1798 = vmatprep.subr.mxu0 0.0
        %1799 = vmatpush1.msra.mxu0 0.0
        %1800 = vmatprep.subr.mxu0 0.0
        %1801 = vmatpush1.msra.mxu0 0.0
        %1802 = vmatprep.subr.mxu0 0.0
        %1803 = vmatpush1.msra.mxu0 0.0
        %1804 = vmatprep.subr.mxu0 0.0
        %1805 = vmatpush1.msra.mxu0 0.0
        %1806 = vmatprep.subr.mxu0 0.0
        %1807 = vmatpush1.msra.mxu0 0.0
        %1808 = vmatprep.subr.mxu0 0.0
        %1809 = vmatpush1.msra.mxu0 0.0
        %1810 = vmatprep.subr.mxu0 0.0
        %1811 = vmatpush1.msra.mxu0 0.0
        %1812 = vmatprep.subr.mxu0 0.0
        %1813 = vmatpush1.msra.mxu0 0.0
        %1814 = vmatprep.subr.mxu0 0.0
        %1815 = vmatpush1.msra.mxu0 0.0
        %1816 = vmatprep.subr.mxu0 0.0
        %1817 = vmatpush1.msra.mxu0 0.0
        %1818 = vmatprep.subr.mxu0 0.0
        %1819 = vmatpush1.msra.mxu0 0.0
        %1820 = vmatprep.subr.mxu0 0.0
        %1821 = vmatpush1.msra.mxu0 0.0
        %1822 = vmatprep.subr.mxu0 0.0
        %1823 = vmatpush1.msra.mxu0 0.0
        %1824 = vmatprep.subr.mxu0 0.0
        %1825 = vmatpush1.msra.mxu0 0.0
        %1826 = vmatprep.subr.mxu0 0.0
        %1827 = vmatpush1.msra.mxu0 0.0
        %1828 = vmatprep.subr.mxu0 0.0
        %1829 = vmatpush1.msra.mxu0 0.0
        %1830 = vmatprep.subr.mxu0 0.0
        %1831 = vmatpush1.msra.mxu0 0.0
        %1832 = vmatprep.subr.mxu0 0.0
        %1833 = vmatpush1.msra.mxu0 0.0
        %1834 = vmatprep.subr.mxu0 0.0
        %1835 = vmatpush1.msra.mxu0 0.0
        %1836 = vmatprep.subr.mxu0 0.0
        %1837 = vmatpush1.msra.mxu0 0.0
        %1838 = vmatprep.subr.mxu0 0.0
        %1839 = vmatpush1.msra.mxu0 0.0
        %1840 = vmatprep.subr.mxu0 0.0
        %1841 = vmatpush1.msra.mxu0 0.0
        %1842 = vmatprep.subr.mxu0 0.0
        %1843 = vmatpush1.msra.mxu0 0.0
        %1844 = vmatprep.subr.mxu0 0.0
        %1845 = vmatpush1.msra.mxu0 0.0
        %1846 = vmatprep.subr.mxu0 0.0
        %1847 = vmatpush1.msra.mxu0 0.0
        %1848 = vmatprep.subr.mxu0 0.0
        %1849 = vmatpush1.msra.mxu0 0.0
        %1850 = vmatprep.subr.mxu0 0.0
        %1851 = vmatpush1.msra.mxu0 0.0
        %1852 = vmatprep.mubr.f32.mxu0 0.0
        %1853 = vmatmul.mubr.f32.gmra.mrb[0].mxu0 %v1510
        %v1854 = vpop.f32.mrb[0].mxu0
        %v1855 = vadd.f32 %v1492, %v1854
        %v1856 = vpop.f32.mrb[0].mxu0
        %v1857 = vadd.f32 %v1492, %v1856
        %1858 = vmatprep.mubr.f32.mxu0 0.0
        %1859 = vmatmul.mubr.f32.gmra.mrb[0].mxu0 %v1513
        %v1860 = vpop.f32.mrb[0].mxu0
        %v1861 = vadd.f32 %v1497, %v1860
        %v1862 = vpop.f32.mrb[0].mxu0
        %v1863 = vadd.f32 %v1497, %v1862
        %1864 = vmatprep.mubr.f32.mxu0 0.0
        %1865 = vmatmul.mubr.f32.gmra.mrb[0].mxu0 %v1516
        %v1866 = vpop.f32.mrb[0].mxu0
        %v1867 = vadd.f32 %v1502, %v1866
        %v1868 = vpop.f32.mrb[0].mxu0
        %v1869 = vadd.f32 %v1502, %v1868
        %1870 = vmatprep.mubr.f32.mxu0 0.0
        %1871 = vmatmul.mubr.f32.gmra.mrb[0].mxu0 %v1519
        %v1872 = vpop.f32.mrb[0].mxu0
        %v1873 = vadd.f32 %v1507, %v1872
        %v1874 = vpop.f32.mrb[0].mxu0
        %v1875 = vadd.f32 %v1507, %v1874
        %1876 = vdwg.mxu0
        %v1877 = vtanh.pop %v1588
        %v1878 = vtanh.pop %v1590
        %v1879 = vtanh.pop %v1677
        %v1880 = vtanh.pop %v1679
        %v1881 = vtanh.pop %v1766
        %v1882 = vtanh.pop %v1768
        %v1883 = vtanh.pop %v1855
        %v1884 = vtanh.pop %v1857
        %v1885 = vtanh.pop %v1594
        %v1886 = vtanh.pop %v1596
        %v1887 = vtanh.pop %v1683
        %v1888 = vtanh.pop %v1685
        %v1889 = vtanh.pop %v1772
        %v1890 = vtanh.pop %v1774
        %v1891 = vtanh.pop %v1861
        %v1892 = vtanh.pop %v1863
        %v1893 = vtanh.pop %v1600
        %v1894 = vtanh.pop %v1602
        %v1895 = vtanh.pop %v1689
        %v1896 = vtanh.pop %v1691
        %v1897 = vtanh.pop %v1778
        %v1898 = vtanh.pop %v1780
        %v1899 = vtanh.pop %v1867
        %v1900 = vtanh.pop %v1869
        %v1901 = vtanh.pop %v1606
        %v1902 = vtanh.pop %v1608
        %v1903 = vtanh.pop %v1695
        %v1904 = vtanh.pop %v1697
        %v1905 = vtanh.pop %v1784
        %v1906 = vtanh.pop %v1786
        %v1907 = vtanh.pop %v1873
        %v1908 = vtanh.pop %v1875
        %v1909 = vld [vmem:[%s5] sm:$0x7]
        %v1910 = vld [vmem:[%s6] sm:$0x7]
        %1912 = vset.pattern.permute.xlu0 0
        %1913 = vperm.xlu0 %1912, %v1910
        %v1914 = vpop.permute.xlu0 %1913
        %v1917 = vsel %vm648, %v1909, 0
        %1919 = vmatprep.subr.mxu0 %v1878
        %1920 = vmatpush1.msra.mxu0 %v1877
        %1921 = vmatprep.subr.mxu0 %v1886
        %1922 = vmatpush1.msra.mxu0 %v1885
        %1923 = vmatprep.subr.mxu0 %v1894
        %1924 = vmatpush1.msra.mxu0 %v1893
        %1925 = vmatprep.subr.mxu0 %v1902
        %1926 = vmatpush1.msra.mxu0 %v1901
        %1927 = vmatprep.subr.mxu0 0.0
        %1928 = vmatpush1.msra.mxu0 0.0
        %1929 = vmatprep.subr.mxu0 0.0
        %1930 = vmatpush1.msra.mxu0 0.0
        %1931 = vmatprep.subr.mxu0 0.0
        %1932 = vmatpush1.msra.mxu0 0.0
        %1933 = vmatprep.subr.mxu0 0.0
        %1934 = vmatpush1.msra.mxu0 0.0
        %1935 = vmatprep.subr.mxu0 0.0
        %1936 = vmatpush1.msra.mxu0 0.0
        %1937 = vmatprep.subr.mxu0 0.0
        %1938 = vmatpush1.msra.mxu0 0.0
        %1939 = vmatprep.subr.mxu0 0.0
        %1940 = vmatpush1.msra.mxu0 0.0
        %1941 = vmatprep.subr.mxu0 0.0
        %1942 = vmatpush1.msra.mxu0 0.0
        %1943 = vmatprep.subr.mxu0 0.0
        %1944 = vmatpush1.msra.mxu0 0.0
        %1945 = vmatprep.subr.mxu0 0.0
        %1946 = vmatpush1.msra.mxu0 0.0
        %1947 = vmatprep.subr.mxu0 0.0
        %1948 = vmatpush1.msra.mxu0 0.0
        %1949 = vmatprep.subr.mxu0 0.0
        %1950 = vmatpush1.msra.mxu0 0.0
        %1951 = vmatprep.subr.mxu0 0.0
        %1952 = vmatpush1.msra.mxu0 0.0
        %1953 = vmatprep.subr.mxu0 0.0
        %1954 = vmatpush1.msra.mxu0 0.0
        %1955 = vmatprep.subr.mxu0 0.0
        %1956 = vmatpush1.msra.mxu0 0.0
        %1957 = vmatprep.subr.mxu0 0.0
        %1958 = vmatpush1.msra.mxu0 0.0
        %1959 = vmatprep.subr.mxu0 0.0
        %1960 = vmatpush1.msra.mxu0 0.0
        %1961 = vmatprep.subr.mxu0 0.0
        %1962 = vmatpush1.msra.mxu0 0.0
        %1963 = vmatprep.subr.mxu0 0.0
        %1964 = vmatpush1.msra.mxu0 0.0
        %1965 = vmatprep.subr.mxu0 0.0
        %1966 = vmatpush1.msra.mxu0 0.0
        %1967 = vmatprep.subr.mxu0 0.0
        %1968 = vmatpush1.msra.mxu0 0.0
        %1969 = vmatprep.subr.mxu0 0.0
        %1970 = vmatpush1.msra.mxu0 0.0
        %1971 = vmatprep.subr.mxu0 0.0
        %1972 = vmatpush1.msra.mxu0 0.0
        %1973 = vmatprep.subr.mxu0 0.0
        %1974 = vmatpush1.msra.mxu0 0.0
        %1975 = vmatprep.subr.mxu0 0.0
        %1976 = vmatpush1.msra.mxu0 0.0
        %1977 = vmatprep.subr.mxu0 0.0
        %1978 = vmatpush1.msra.mxu0 0.0
        %1979 = vmatprep.subr.mxu0 0.0
        %1980 = vmatpush1.msra.mxu0 0.0
        %1981 = vmatprep.subr.mxu0 0.0
        %1982 = vmatpush1.msra.mxu0 0.0
        %1983 = vmatprep.mubr.f32.mxu0 0.0
        %1984 = vmatmul.mubr.f32.gmra.mrb[0].mxu0 %v1917
        %v1985 = vpop.f32.mrb[0].mxu0
        %v1986 = vadd.f32 %v1914, %v1985
        %v1987 = vpop.f32.mrb[0].mxu0
        %v1988 = vadd.f32 %v1914, %v1987
        %1989 = vdwg.mxu0
        %1990 = vmatprep.subr.mxu0 %v1880
        %1991 = vmatpush1.msra.mxu0 %v1879
        %1992 = vmatprep.subr.mxu0 %v1888
        %1993 = vmatpush1.msra.mxu0 %v1887
        %1994 = vmatprep.subr.mxu0 %v1896
        %1995 = vmatpush1.msra.mxu0 %v1895
        %1996 = vmatprep.subr.mxu0 %v1904
        %1997 = vmatpush1.msra.mxu0 %v1903
        %1998 = vmatprep.subr.mxu0 0.0
        %1999 = vmatpush1.msra.mxu0 0.0
        %2000 = vmatprep.subr.mxu0 0.0
        %2001 = vmatpush1.msra.mxu0 0.0
        %2002 = vmatprep.subr.mxu0 0.0
        %2003 = vmatpush1.msra.mxu0 0.0
        %2004 = vmatprep.subr.mxu0 0.0
        %2005 = vmatpush1.msra.mxu0 0.0
        %2006 = vmatprep.subr.mxu0 0.0
        %2007 = vmatpush1.msra.mxu0 0.0
        %2008 = vmatprep.subr.mxu0 0.0
        %2009 = vmatpush1.msra.mxu0 0.0
        %2010 = vmatprep.subr.mxu0 0.0
        %2011 = vmatpush1.msra.mxu0 0.0
        %2012 = vmatprep.subr.mxu0 0.0
        %2013 = vmatpush1.msra.mxu0 0.0
        %2014 = vmatprep.subr.mxu0 0.0
        %2015 = vmatpush1.msra.mxu0 0.0
        %2016 = vmatprep.subr.mxu0 0.0
        %2017 = vmatpush1.msra.mxu0 0.0
        %2018 = vmatprep.subr.mxu0 0.0
        %2019 = vmatpush1.msra.mxu0 0.0
        %2020 = vmatprep.subr.mxu0 0.0
        %2021 = vmatpush1.msra.mxu0 0.0
        %2022 = vmatprep.subr.mxu0 0.0
        %2023 = vmatpush1.msra.mxu0 0.0
        %2024 = vmatprep.subr.mxu0 0.0
        %2025 = vmatpush1.msra.mxu0 0.0
        %2026 = vmatprep.subr.mxu0 0.0
        %2027 = vmatpush1.msra.mxu0 0.0
        %2028 = vmatprep.subr.mxu0 0.0
        %2029 = vmatpush1.msra.mxu0 0.0
        %2030 = vmatprep.subr.mxu0 0.0
        %2031 = vmatpush1.msra.mxu0 0.0
        %2032 = vmatprep.subr.mxu0 0.0
        %2033 = vmatpush1.msra.mxu0 0.0
        %2034 = vmatprep.subr.mxu0 0.0
        %2035 = vmatpush1.msra.mxu0 0.0
        %2036 = vmatprep.subr.mxu0 0.0
        %2037 = vmatpush1.msra.mxu0 0.0
        %2038 = vmatprep.subr.mxu0 0.0
        %2039 = vmatpush1.msra.mxu0 0.0
        %2040 = vmatprep.subr.mxu0 0.0
        %2041 = vmatpush1.msra.mxu0 0.0
        %2042 = vmatprep.subr.mxu0 0.0
        %2043 = vmatpush1.msra.mxu0 0.0
        %2044 = vmatprep.subr.mxu0 0.0
        %2045 = vmatpush1.msra.mxu0 0.0
        %2046 = vmatprep.subr.mxu0 0.0
        %2047 = vmatpush1.msra.mxu0 0.0
        %2048 = vmatprep.subr.mxu0 0.0
        %2049 = vmatpush1.msra.mxu0 0.0
        %2050 = vmatprep.subr.mxu0 0.0
        %2051 = vmatpush1.msra.mxu0 0.0
        %2052 = vmatprep.subr.mxu0 0.0
        %2053 = vmatpush1.msra.mxu0 0.0
        %2054 = vmatprep.mubr.f32.mxu0 0.0
        %2055 = vmatmul.mubr.f32.gmra.mrb[0].mxu0 %v1917
        %v2056 = vpop.f32.mrb[0].mxu0
        %v2057 = vadd.f32 %v1914, %v2056
        %v2058 = vpop.f32.mrb[0].mxu0
        %v2059 = vadd.f32 %v1914, %v2058
        %2060 = vdwg.mxu0
        %2061 = vmatprep.subr.mxu0 %v1882
        %2062 = vmatpush1.msra.mxu0 %v1881
        %2063 = vmatprep.subr.mxu0 %v1890
        %2064 = vmatpush1.msra.mxu0 %v1889
        %2065 = vmatprep.subr.mxu0 %v1898
        %2066 = vmatpush1.msra.mxu0 %v1897
        %2067 = vmatprep.subr.mxu0 %v1906
        %2068 = vmatpush1.msra.mxu0 %v1905
        %2069 = vmatprep.subr.mxu0 0.0
        %2070 = vmatpush1.msra.mxu0 0.0
        %2071 = vmatprep.subr.mxu0 0.0
        %2072 = vmatpush1.msra.mxu0 0.0
        %2073 = vmatprep.subr.mxu0 0.0
        %2074 = vmatpush1.msra.mxu0 0.0
        %2075 = vmatprep.subr.mxu0 0.0
        %2076 = vmatpush1.msra.mxu0 0.0
        %2077 = vmatprep.subr.mxu0 0.0
        %2078 = vmatpush1.msra.mxu0 0.0
        %2079 = vmatprep.subr.mxu0 0.0
        %2080 = vmatpush1.msra.mxu0 0.0
        %2081 = vmatprep.subr.mxu0 0.0
        %2082 = vmatpush1.msra.mxu0 0.0
        %2083 = vmatprep.subr.mxu0 0.0
        %2084 = vmatpush1.msra.mxu0 0.0
        %2085 = vmatprep.subr.mxu0 0.0
        %2086 = vmatpush1.msra.mxu0 0.0
        %2087 = vmatprep.subr.mxu0 0.0
        %2088 = vmatpush1.msra.mxu0 0.0
        %2089 = vmatprep.subr.mxu0 0.0
        %2090 = vmatpush1.msra.mxu0 0.0
        %2091 = vmatprep.subr.mxu0 0.0
        %2092 = vmatpush1.msra.mxu0 0.0
        %2093 = vmatprep.subr.mxu0 0.0
        %2094 = vmatpush1.msra.mxu0 0.0
        %2095 = vmatprep.subr.mxu0 0.0
        %2096 = vmatpush1.msra.mxu0 0.0
        %2097 = vmatprep.subr.mxu0 0.0
        %2098 = vmatpush1.msra.mxu0 0.0
        %2099 = vmatprep.subr.mxu0 0.0
        %2100 = vmatpush1.msra.mxu0 0.0
        %2101 = vmatprep.subr.mxu0 0.0
        %2102 = vmatpush1.msra.mxu0 0.0
        %2103 = vmatprep.subr.mxu0 0.0
        %2104 = vmatpush1.msra.mxu0 0.0
        %2105 = vmatprep.subr.mxu0 0.0
        %2106 = vmatpush1.msra.mxu0 0.0
        %2107 = vmatprep.subr.mxu0 0.0
        %2108 = vmatpush1.msra.mxu0 0.0
        %2109 = vmatprep.subr.mxu0 0.0
        %2110 = vmatpush1.msra.mxu0 0.0
        %2111 = vmatprep.subr.mxu0 0.0
        %2112 = vmatpush1.msra.mxu0 0.0
        %2113 = vmatprep.subr.mxu0 0.0
        %2114 = vmatpush1.msra.mxu0 0.0
        %2115 = vmatprep.subr.mxu0 0.0
        %2116 = vmatpush1.msra.mxu0 0.0
        %2117 = vmatprep.subr.mxu0 0.0
        %2118 = vmatpush1.msra.mxu0 0.0
        %2119 = vmatprep.subr.mxu0 0.0
        %2120 = vmatpush1.msra.mxu0 0.0
        %2121 = vmatprep.subr.mxu0 0.0
        %2122 = vmatpush1.msra.mxu0 0.0
        %2123 = vmatprep.subr.mxu0 0.0
        %2124 = vmatpush1.msra.mxu0 0.0
        %2125 = vmatprep.mubr.f32.mxu0 0.0
        %2126 = vmatmul.mubr.f32.gmra.mrb[0].mxu0 %v1917
        %v2127 = vpop.f32.mrb[0].mxu0
        %v2128 = vadd.f32 %v1914, %v2127
        %v2129 = vpop.f32.mrb[0].mxu0
        %v2130 = vadd.f32 %v1914, %v2129
        %2131 = vdwg.mxu0
        %2132 = vmatprep.subr.mxu0 %v1884
        %2133 = vmatpush1.msra.mxu0 %v1883
        %2134 = vmatprep.subr.mxu0 %v1892
        %2135 = vmatpush1.msra.mxu0 %v1891
        %2136 = vmatprep.subr.mxu0 %v1900
        %2137 = vmatpush1.msra.mxu0 %v1899
        %2138 = vmatprep.subr.mxu0 %v1908
        %2139 = vmatpush1.msra.mxu0 %v1907
        %2140 = vmatprep.subr.mxu0 0.0
        %2141 = vmatpush1.msra.mxu0 0.0
        %2142 = vmatprep.subr.mxu0 0.0
        %2143 = vmatpush1.msra.mxu0 0.0
        %2144 = vmatprep.subr.mxu0 0.0
        %2145 = vmatpush1.msra.mxu0 0.0
        %2146 = vmatprep.subr.mxu0 0.0
        %2147 = vmatpush1.msra.mxu0 0.0
        %2148 = vmatprep.subr.mxu0 0.0
        %2149 = vmatpush1.msra.mxu0 0.0
        %2150 = vmatprep.subr.mxu0 0.0
        %2151 = vmatpush1.msra.mxu0 0.0
        %2152 = vmatprep.subr.mxu0 0.0
        %2153 = vmatpush1.msra.mxu0 0.0
        %2154 = vmatprep.subr.mxu0 0.0
        %2155 = vmatpush1.msra.mxu0 0.0
        %2156 = vmatprep.subr.mxu0 0.0
        %2157 = vmatpush1.msra.mxu0 0.0
        %2158 = vmatprep.subr.mxu0 0.0
        %2159 = vmatpush1.msra.mxu0 0.0
        %2160 = vmatprep.subr.mxu0 0.0
        %2161 = vmatpush1.msra.mxu0 0.0
        %2162 = vmatprep.subr.mxu0 0.0
        %2163 = vmatpush1.msra.mxu0 0.0
        %2164 = vmatprep.subr.mxu0 0.0
        %2165 = vmatpush1.msra.mxu0 0.0
        %2166 = vmatprep.subr.mxu0 0.0
        %2167 = vmatpush1.msra.mxu0 0.0
        %2168 = vmatprep.subr.mxu0 0.0
        %2169 = vmatpush1.msra.mxu0 0.0
        %2170 = vmatprep.subr.mxu0 0.0
        %2171 = vmatpush1.msra.mxu0 0.0
        %2172 = vmatprep.subr.mxu0 0.0
        %2173 = vmatpush1.msra.mxu0 0.0
        %2174 = vmatprep.subr.mxu0 0.0
        %2175 = vmatpush1.msra.mxu0 0.0
        %2176 = vmatprep.subr.mxu0 0.0
        %2177 = vmatpush1.msra.mxu0 0.0
        %2178 = vmatprep.subr.mxu0 0.0
        %2179 = vmatpush1.msra.mxu0 0.0
        %2180 = vmatprep.subr.mxu0 0.0
        %2181 = vmatpush1.msra.mxu0 0.0
        %2182 = vmatprep.subr.mxu0 0.0
        %2183 = vmatpush1.msra.mxu0 0.0
        %2184 = vmatprep.subr.mxu0 0.0
        %2185 = vmatpush1.msra.mxu0 0.0
        %2186 = vmatprep.subr.mxu0 0.0
        %2187 = vmatpush1.msra.mxu0 0.0
        %2188 = vmatprep.subr.mxu0 0.0
        %2189 = vmatpush1.msra.mxu0 0.0
        %2190 = vmatprep.subr.mxu0 0.0
        %2191 = vmatpush1.msra.mxu0 0.0
        %2192 = vmatprep.subr.mxu0 0.0
        %2193 = vmatpush1.msra.mxu0 0.0
        %2194 = vmatprep.subr.mxu0 0.0
        %2195 = vmatpush1.msra.mxu0 0.0
        %2196 = vmatprep.mubr.f32.mxu0 0.0
        %2197 = vmatmul.mubr.f32.gmra.mrb[0].mxu0 %v1917
        %v2198 = vpop.f32.mrb[0].mxu0
        %v2199 = vadd.f32 %v1914, %v2198
        %v2200 = vpop.f32.mrb[0].mxu0
        %v2201 = vadd.f32 %v1914, %v2200
        %2202 = vdwg.mxu0
        %v2203 = vxor.u32 %v1986, 2147483648
        %v2204 = vxor.u32 %v1988, 2147483648
        %v2205 = vxor.u32 %v2057, 2147483648
        %v2206 = vxor.u32 %v2059, 2147483648
        %v2207 = vxor.u32 %v2128, 2147483648
        %v2208 = vxor.u32 %v2130, 2147483648
        %v2209 = vxor.u32 %v2199, 2147483648
        %v2210 = vxor.u32 %v2201, 2147483648
        %v2211 = vmul.f32 %v2203, 1.442695
        %v2212 = vpow.pop %v2211
        %v2213 = vmul.f32 %v2204, 1.442695
        %v2214 = vpow.pop %v2213
        %v2215 = vmul.f32 %v2205, 1.442695
        %v2216 = vpow.pop %v2215
        %v2217 = vmul.f32 %v2206, 1.442695
        %v2218 = vpow.pop %v2217
        %v2219 = vmul.f32 %v2207, 1.442695
        %v2220 = vpow.pop %v2219
        %v2221 = vmul.f32 %v2208, 1.442695
        %v2222 = vpow.pop %v2221
        %v2223 = vmul.f32 %v2209, 1.442695
        %v2224 = vpow.pop %v2223
        %v2225 = vmul.f32 %v2210, 1.442695
        %v2226 = vpow.pop %v2225
        %v2227 = vadd.f32 %v2212, 1.0
        %v2228 = vadd.f32 %v2214, 1.0
        %v2229 = vadd.f32 %v2216, 1.0
        %v2230 = vadd.f32 %v2218, 1.0
        %v2231 = vadd.f32 %v2220, 1.0
        %v2232 = vadd.f32 %v2222, 1.0
        %v2233 = vadd.f32 %v2224, 1.0
        %v2234 = vadd.f32 %v2226, 1.0
        %v2235 = vrcp.pop %v2227
        %v2236 = vmul.f32 1.0, %v2235
        %v2237 = vrcp.pop %v2228
        %v2238 = vmul.f32 1.0, %v2237
        %v2239 = vrcp.pop %v2229
        %v2240 = vmul.f32 1.0, %v2239
        %v2241 = vrcp.pop %v2230
        %v2242 = vmul.f32 1.0, %v2241
        %v2243 = vrcp.pop %v2231
        %v2244 = vmul.f32 1.0, %v2243
        %v2245 = vrcp.pop %v2232
        %v2246 = vmul.f32 1.0, %v2245
        %v2247 = vrcp.pop %v2233
        %v2248 = vmul.f32 1.0, %v2247
        %v2249 = vrcp.pop %v2234
        %v2250 = vmul.f32 1.0, %v2249
        %v2259 = vcombine.low %v2236, %v2238
        %v2260 = vcombine.low %v2240, %v2242
        %v2261 = vcombine.low %v2244, %v2246
        %v2262 = vcombine.low %v2248, %v2250
        %2267 = vst [vmem:[%s272] sm:$0x77] %v2259
        %2268 = vst [vmem:[%s272 + $0x8] sm:$0x77] %v2260
        %2269 = vst [vmem:[%s272 + $0x10] sm:$0x77] %v2261
        %2270 = vst [vmem:[%s272 + $0x18] sm:$0x77] %v2262
        %s2271 = sand.u32 %s181, 1
        %s2272 = scalar_lea.sflag [#allocation3], %s2271
        %s2273 = sand.u32 %s181, 1
        %s2274 = smul.addr %s2273, 32
        %s2275 = scalar_lea.vmem [#allocation2], %s2274
        // Predicated region
        $region49: #{tpu_custom_call.1} parent=47 // pred_check
          %p2276 = pneg %p191
        $region50: #{tpu_custom_call.1} parent=47 // pred_check_branch
          %2278 = sbr.rel (%p2276) target = $region52
        $region51: #{tpu_custom_call.1} parent=47 // pred_region
          %s2279 = smul.u32 8, %s21
          %s2281 = ssub.s32 512, 512
          %2282 = vsyncadd %s2272, %s2281
          %s2283 = smul.addr %s2279, 64
          %s2284 = scalar_lea.hbm %s7, %s2283
          %s2286 = sshll.u32 %s2275, 4
          %s2287 = int_to_ptr.vmem [resolvable:$true] %s2286
          %2289 = dma.vmem_to_hbm [thread:$0]  %s2287, 512, %s2284, %s2272
        $region52: #{tpu_custom_call.1} parent=47 // pred_fallthru
          _
      $region48: #{tpu_custom_call.1} parent=5 // pred_fallthru
        _
      %p2290 = scmp.le.s32.totalorder 2, %s16
      // Predicated region
      $region53: #{tpu_custom_call.1} parent=5 // pred_check
        %p2291 = pneg %p2290
      $region54: #{tpu_custom_call.1} parent=5 // pred_check_branch
        %2293 = sbr.rel (%p2291) target = $region56
      $region55: #{tpu_custom_call.1} parent=5 // pred_region
        %s2294 = ssub.s32 %s16, 2
        // Predicated region
        $region57: #{tpu_custom_call.1} parent=55 // pred_check
          %p2295 = pneg %p197
        $region58: #{tpu_custom_call.1} parent=55 // pred_check_branch
          %2297 = sbr.rel (%p2295) target = $region60
        $region59: #{tpu_custom_call.1} parent=55 // pred_region
          %s2298 = sand.u32 %s182, 1
          %s2299 = scalar_lea.sflag [#allocation3], %s2298
          %s2300 = sand.u32 %s182, 1
          %s2301 = smul.addr %s2300, 32
          %s2302 = scalar_lea.vmem [#allocation2], %s2301
          %2303 = dma.done %s2299, 512
        $region60: #{tpu_custom_call.1} parent=55 // pred_fallthru
          _
      $region56: #{tpu_custom_call.1} parent=5 // pred_fallthru
        _
    $region6: #{tpu_custom_call.1} parent=1 // loop_footer
      %s20 = sadd.s32 1, %s16
    $region7: #{tpu_custom_call.1} parent=1 // loop_footer_branch
      %15 = sbr.rel target = $region3
    $region8: #{tpu_custom_call.1} parent=1 // loop_exit
      _
    %2304 = vsyncpa [#allocation3], 1
    %s2305 = scalar_lea.sflag [#allocation3], 1
    %2306 = vsyncpa %s2305, 1

</llo_original>
